<compile_context>
chip_gen: v6e
topology: v6e:2x2x1
jax: 0.10.0
libtpu: 0.0.40
codegen_flags: <defaults>
</compile_context>

<pallas_src>
import jax
import jax.numpy as jnp
from jax import lax
from jax.experimental import pallas as pl
from jax.experimental.pallas import tpu as pltpu


# --------------------------- fused LSTM + FC kernel ---------------------------
def _lstm_fused_kernel(x_hbm, wih_ref, whh_ref, b_ref, fcw_ref, fcb_ref,
                       out_ref, seq_scr, xp_scr, h_scr, c_scr, x_sem):
    """Grid = (num_layers, T // Tc).

    x_hbm   : (T, Bp, Dp)   full padded input, left in HBM (pl.ANY)
    wih_ref : (1, Dp, 4H)   this layer's input weights (permuted/transposed/padded)
    whh_ref : (1, H, 4H)    this layer's recurrent weights (permuted/transposed)
    b_ref   : (1, 1, 4H)    b_ih + b_hh (permuted)
    fcw_ref : (H, C)        fc weight (transposed)
    fcb_ref : (1, C)        fc bias
    out_ref : (1, Bp, C)    fc(h_T) for this layer
    seq_scr : (T, Bp, Dp)   VMEM buffer: layer input / next layer's input
    xp_scr  : (Tc, Bp, 4H)  hoisted input projection (+bias) for this chunk
    h_scr   : (Bp, H)       hidden state (persists across chunks)
    c_scr   : (Bp, H)       cell state   (persists across chunks)
    x_sem   : ()            DMA semaphore for the one-time x copy
    """
    l = pl.program_id(0)
    tc = pl.program_id(1)
    n_chunks = pl.num_programs(1)

    Tc, Bp, _ = xp_scr.shape
    Dp = seq_scr.shape[2]
    H = h_scr.shape[1]
    base = pl.multiple_of(tc * Tc, Tc)

    # One-time bulk DMA of the whole padded input into VMEM: x is only read by
    # layer 0, so fetch it exactly once instead of once per layer.
    @pl.when(jnp.logical_and(l == 0, tc == 0))
    def _():
        cp = pltpu.make_async_copy(x_hbm, seq_scr, x_sem)
        cp.start()
        cp.wait()

    # New layer -> reset recurrent state.
    @pl.when(tc == 0)
    def _():
        h_scr[...] = jnp.zeros_like(h_scr)
        c_scr[...] = jnp.zeros_like(c_scr)

    # Layer input: layer 0 reads x, deeper layers read the previous layer's
    # hidden sequence; both live in seq_scr (no HBM round trip).
    x_in = seq_scr[pl.ds(base, Tc)]                          # (Tc, Bp, Dp)

    # Hoisted input projection with the bias folded in: one bulk MXU matmul
    # per chunk; only the recurrent matmul + gates stay on the serial path.
    xproj = jnp.dot(x_in.reshape(Tc * Bp, Dp), wih_ref[0],
                    preferred_element_type=jnp.float32) + b_ref[0]
    xp_scr[...] = xproj.reshape(Tc, Bp, 4 * H)

    whh = whh_ref[0]                                         # (H, 4H)

    def step(t, carry):
        h, c = carry
        # Only the recurrent matmul remains on the serial critical path.
        gates = xp_scr[t] + jnp.dot(h, whh, preferred_element_type=jnp.float32)
        # Gate order permuted host-side to [i, f, o, g]: one sigmoid over the
        # contiguous 3H sigmoid gates + one tanh for g.
        sig = jax.nn.sigmoid(gates[:, :3 * H])
        i_g = sig[:, 0 * H:1 * H]
        f_g = sig[:, 1 * H:2 * H]
        o_g = sig[:, 2 * H:3 * H]
        g_g = jnp.tanh(gates[:, 3 * H:])
        c_new = f_g * c + i_g * g_g
        h_new = o_g * jnp.tanh(c_new)
        # Hand h to the next layer.  Only the first H columns are ever read
        # back (deeper-layer W_ih rows H:Dp are zero), so no zero-concat and
        # no stores to the padded tail.
        if Dp == H:
            seq_scr[base + t] = h_new
        else:
            seq_scr[base + t, :, :H] = h_new
        return h_new, c_new

    # Adaptive unroll: full unroll for small states; partial unroll when the
    # live (Bp, 4H) gate tiles would overflow the 64-entry vreg file.
    unroll = Tc if Bp * 4 * H <= 4096 else min(4, Tc)
    h_fin, c_fin = lax.fori_loop(0, Tc, step, (h_scr[...], c_scr[...]),
                                 unroll=unroll)
    h_scr[...] = h_fin
    c_scr[...] = c_fin

    # Fused FC on the last hidden state of this layer (h_out never hits HBM).
    @pl.when(tc == n_chunks - 1)
    def _():
        out_ref[0] = (jnp.dot(h_fin, fcw_ref[...],
                              preferred_element_type=jnp.float32)
                      + fcb_ref[...])


def _pick_chunk(T):
    for c in (32, 16, 8, 4, 2, 1):
        if T % c == 0:
            return c
    return 1


def _permute_gate_rows(w, H):
    """PyTorch gate-row order [i, f, g, o] -> [i, f, o, g] (sigmoids contiguous)."""
    return jnp.concatenate(
        [w[0 * H:1 * H], w[1 * H:2 * H], w[3 * H:4 * H], w[2 * H:3 * H]], axis=0)


# ------------------------------ model wrapper ---------------------------------
def lstm_model_forward(x, params):
    """x: (B, T, input_size) -> (num_layers * B, num_classes)."""
    B, T, D = x.shape
    lstm_params = params["lstm"]
    L = len(lstm_params)
    H = lstm_params[0][1].shape[1]          # w_hh: (4H, H)
    C = params["fc_w"].shape[0]

    Bp = max(8, ((B + 7) // 8) * 8)         # pad batch to sublane multiple
    Dp = max(D, H)                          # common (padded) feature width
    Tc = _pick_chunk(T)

    # Time-major, padded input: (T, Bp, Dp).
    x_tbd = jnp.transpose(x, (1, 0, 2))
    x_pad = jnp.pad(x_tbd, ((0, 0), (0, Bp - B), (0, Dp - D)))

    # Stack per-layer weights: permute gate rows to [i, f, o, g], transpose for
    # right-multiplication, pad the input-feature axis so one tensor serves
    # both layer 0 and deeper layers.
    wih_all = jnp.stack([
        jnp.pad(jnp.transpose(_permute_gate_rows(w_ih, H)),
                ((0, Dp - w_ih.shape[1]), (0, 0)))
        for (w_ih, _, _, _) in lstm_params])                         # (L, Dp, 4H)
    whh_all = jnp.stack([jnp.transpose(_permute_gate_rows(w_hh, H))
                         for (_, w_hh, _, _) in lstm_params])        # (L, H, 4H)
    bias_all = jnp.stack([
        _permute_gate_rows(b_ih + b_hh, H).reshape(1, 4 * H)
        for (_, _, b_ih, b_hh) in lstm_params])                      # (L, 1, 4H)
    fc_wt = jnp.transpose(params["fc_w"])                            # (H, C)
    fc_b = params["fc_b"].reshape(1, C)                              # (1, C)

    # VMEM-aware scoped limit (v5e default is only 16 MiB).
    scratch_bytes = 4 * (T * Bp * Dp + Tc * Bp * 4 * H + 2 * Bp * H)
    vmem_limit = int(min(64 * 1024 * 1024,
                         max(32 * 1024 * 1024, 4 * scratch_bytes)))

    out = pl.pallas_call(
        _lstm_fused_kernel,
        out_shape=jax.ShapeDtypeStruct((L, Bp, C), jnp.float32),
        grid_spec=pltpu.PrefetchScalarGridSpec(
            num_scalar_prefetch=0,
            grid=(L, T // Tc),
            in_specs=[
                pl.BlockSpec(memory_space=pl.ANY),                   # x in HBM
                pl.BlockSpec((1, Dp, 4 * H), lambda l, t: (l, 0, 0)),
                pl.BlockSpec((1, H, 4 * H), lambda l, t: (l, 0, 0)),
                pl.BlockSpec((1, 1, 4 * H), lambda l, t: (l, 0, 0)),
                pl.BlockSpec((H, C), lambda l, t: (0, 0)),
                pl.BlockSpec((1, C), lambda l, t: (0, 0)),
            ],
            out_specs=pl.BlockSpec((1, Bp, C), lambda l, t: (l, 0, 0)),
            scratch_shapes=[
                pltpu.VMEM((T, Bp, Dp), jnp.float32),       # layer-to-layer seq
                pltpu.VMEM((Tc, Bp, 4 * H), jnp.float32),   # hoisted x-proj
                pltpu.VMEM((Bp, H), jnp.float32),           # h state
                pltpu.VMEM((Bp, H), jnp.float32),           # c state
                pltpu.SemaphoreType.DMA(()),                # one-time x DMA
            ],
        ),
        compiler_params=pltpu.CompilerParams(
            # layer axis and time axis are both serial recurrences
            dimension_semantics=("arbitrary", "arbitrary"),
            vmem_limit_bytes=vmem_limit),
    )(x_pad, wih_all, whh_all, bias_all, fc_wt, fc_b)

    # Drop batch padding; match h_out.view(-1, hidden) @ fc layout (layer-major).
    return out[:, :B, :].reshape(L * B, C)


# --------------------------- pure-JAX reference check --------------------------
def lstm_model_reference(x, params):
    B = x.shape[0]
    cur = x
    last_hiddens = []
    for (w_ih, w_hh, b_ih, b_hh) in params["lstm"]:
        H = w_hh.shape[1]
        h = jnp.zeros((B, H), jnp.float32)
        c = jnp.zeros((B, H), jnp.float32)
        outs = []
        for t in range(cur.shape[1]):
            g = (jnp.dot(cur[:, t], w_ih.T, precision="highest")
                 + jnp.dot(h, w_hh.T, precision="highest") + b_ih + b_hh)
            i_g = jax.nn.sigmoid(g[:, 0 * H:1 * H])
            f_g = jax.nn.sigmoid(g[:, 1 * H:2 * H])
            g_g = jnp.tanh(g[:, 2 * H:3 * H])
            o_g = jax.nn.sigmoid(g[:, 3 * H:4 * H])
            c = f_g * c + i_g * g_g
            h = o_g * jnp.tanh(c)
            outs.append(h)
        cur = jnp.stack(outs, axis=1)
        last_hiddens.append(h)
    h_out = jnp.stack(last_hiddens, axis=0).reshape(-1, last_hiddens[0].shape[-1])
    return jnp.dot(h_out, params["fc_w"].T, precision="highest") + params["fc_b"]


# ----------------------------------- main --------------------------------------
def make_params(key, num_classes, input_size, hidden_size, num_layers):
    k = 1.0 / jnp.sqrt(hidden_size)
    params = {"lstm": []}
    for layer in range(num_layers):
        d_in = input_size if layer == 0 else hidden_size
        key, k1, k2, k3, k4 = jax.random.split(key, 5)
        w_ih = jax.random.uniform(k1, (4 * hidden_size, d_in), jnp.float32, -k, k)
        w_hh = jax.random.uniform(k2, (4 * hidden_size, hidden_size), jnp.float32, -k, k)
        b_ih = jax.random.uniform(k3, (4 * hidden_size,), jnp.float32, -k, k)
        b_hh = jax.random.uniform(k4, (4 * hidden_size,), jnp.float32, -k, k)
        params["lstm"].append((w_ih, w_hh, b_ih, b_hh))
    key, k5, k6 = jax.random.split(key, 3)
    kf = 1.0 / jnp.sqrt(hidden_size)
    params["fc_w"] = jax.random.uniform(k5, (num_classes, hidden_size), jnp.float32, -kf, kf)
    params["fc_b"] = jax.random.uniform(k6, (num_classes,), jnp.float32, -kf, kf)
    return params


if __name__ == "__main__":
    num_classes, input_size, hidden_size, num_layers, seq_length = 4, 16, 32, 2, 8
    batch = 2

    key = jax.random.PRNGKey(0)
    key, kx = jax.random.split(key)
    x = jax.random.normal(kx, (batch, seq_length, input_size), jnp.float32)
    params = make_params(key, num_classes, input_size, hidden_size, num_layers)

    out = lstm_model_forward(x, params)
    out = jax.block_until_ready(out)

    ref = lstm_model_reference(x, params)
    assert out.shape == (num_layers * batch, num_classes), out.shape
    assert jnp.allclose(out, ref, atol=1e-4, rtol=1e-4), (
        f"max err {jnp.max(jnp.abs(out - ref))}")

    print("KERNEL_OK")
</pallas_src>

<mosaic_0001>
module attributes {stable_mosaic.version = 11 : i64} {
  func.func @_lstm_fused_kernel(%arg0: i32, %arg1: i32, %arg2: memref<8x8x32xf32, #tpu.memory_space<any>>, %arg3: memref<1x32x128xf32, #tpu.memory_space<vmem>>, %arg4: memref<1x32x128xf32, #tpu.memory_space<vmem>>, %arg5: memref<1x1x128xf32, #tpu.memory_space<vmem>>, %arg6: memref<32x4xf32, #tpu.memory_space<vmem>>, %arg7: memref<1x4xf32, #tpu.memory_space<vmem>>, %arg8: memref<1x8x4xf32, #tpu.memory_space<vmem>>, %arg9: memref<8x8x32xf32, #tpu.memory_space<vmem>>, %arg10: memref<8x8x128xf32, #tpu.memory_space<vmem>>, %arg11: memref<8x32xf32, #tpu.memory_space<vmem>>, %arg12: memref<8x32xf32, #tpu.memory_space<vmem>>, %arg13: memref<!tpu.dma_semaphore, #tpu.memory_space<semaphore_mem>>) attributes {dimension_semantics = [#tpu.dimension_semantics<arbitrary>, #tpu.dimension_semantics<arbitrary>], iteration_bounds = array<i64: 2, 1>, scalar_prefetch = 0 : i64, scratch_operands = 5 : i64, tpu.core_type = #tpu.core_type<tc>, window_params = [{}, {transform_indices = @transform_1, window_bounds = array<i64: 1, 32, 128>}, {transform_indices = @transform_2, window_bounds = array<i64: 1, 32, 128>}, {transform_indices = @transform_3, window_bounds = array<i64: 1, 1, 128>}, {pipeline_mode = #tpu.pipeline_mode<synchronous>, transform_indices = @transform_4, window_bounds = array<i64: 32, 4>}, {pipeline_mode = #tpu.pipeline_mode<synchronous>, transform_indices = @transform_5, window_bounds = array<i64: 1, 4>}, {transform_indices = @transform_6, window_bounds = array<i64: 1, 8, 4>}]} {
    %c8_i32 = arith.constant 8 : i32
    %0 = arith.muli %arg1, %c8_i32 : i32
    %1 = tpu.assume_multiple %0, 8 : i32
    %c0_i32 = arith.constant 0 : i32
    %2 = arith.cmpi eq, %arg0, %c0_i32 : i32
    %c0_i32_0 = arith.constant 0 : i32
    %3 = arith.cmpi eq, %arg1, %c0_i32_0 : i32
    %4 = arith.andi %2, %3 : i1
    %5 = arith.extui %4 : i1 to i32
    %c0_i32_1 = arith.constant 0 : i32
    %6 = arith.cmpi ne, %5, %c0_i32_1 : i32
    scf.if %6 {
      tpu.enqueue_dma source(%arg2 : memref<8x8x32xf32, #tpu.memory_space<any>>) target(%arg9 : memref<8x8x32xf32, #tpu.memory_space<vmem>>) target_semaphore(%arg13 : memref<!tpu.dma_semaphore, #tpu.memory_space<semaphore_mem>>)
      tpu.wait_dma2 semaphore(%arg13 : memref<!tpu.dma_semaphore, #tpu.memory_space<semaphore_mem>>) src(%arg2 : memref<8x8x32xf32, #tpu.memory_space<any>>) dst(%arg9 : memref<8x8x32xf32, #tpu.memory_space<vmem>>)
    } else {
    }
    %c0_i32_2 = arith.constant 0 : i32
    %7 = arith.cmpi eq, %arg1, %c0_i32_2 : i32
    %8 = arith.extui %7 : i1 to i32
    %c0_i32_3 = arith.constant 0 : i32
    %9 = arith.cmpi ne, %8, %c0_i32_3 : i32
    scf.if %9 {
      %cst_77 = arith.constant 0.000000e+00 : f32
      %239 = vector.broadcast %cst_77 : f32 to vector<8x32xf32>
      %c0_78 = arith.constant 0 : index
      %c0_79 = arith.constant 0 : index
      %240 = vector.load %arg11[%c0_78, %c0_79] : memref<8x32xf32, #tpu.memory_space<vmem>>, vector<8x32xf32>
      tpu.vector_store %arg11[%c0_78, %c0_79], %239 {strides = array<i32>} : memref<8x32xf32, #tpu.memory_space<vmem>>, vector<8x32xf32>,
      %cst_80 = arith.constant 0.000000e+00 : f32
      %241 = vector.broadcast %cst_80 : f32 to vector<8x32xf32>
      %c0_81 = arith.constant 0 : index
      %c0_82 = arith.constant 0 : index
      %242 = vector.load %arg12[%c0_81, %c0_82] : memref<8x32xf32, #tpu.memory_space<vmem>>, vector<8x32xf32>
      tpu.vector_store %arg12[%c0_81, %c0_82], %241 {strides = array<i32>} : memref<8x32xf32, #tpu.memory_space<vmem>>, vector<8x32xf32>,
    } else {
    }
    %10 = arith.index_cast %1 : i32 to index
    %c0 = arith.constant 0 : index
    %c0_4 = arith.constant 0 : index
    %11 = vector.load %arg9[%10, %c0, %c0_4] : memref<8x8x32xf32, #tpu.memory_space<vmem>>, vector<8x8x32xf32>
    %12 = vector.shape_cast %11 : vector<8x8x32xf32> to vector<64x32xf32>
    %c0_5 = arith.constant 0 : index
    %c0_6 = arith.constant 0 : index
    %c0_7 = arith.constant 0 : index
    %13 = vector.load %arg3[%c0_5, %c0_6, %c0_7] : memref<1x32x128xf32, #tpu.memory_space<vmem>>, vector<1x32x128xf32>
    %14 = vector.shape_cast %13 : vector<1x32x128xf32> to vector<32x128xf32>
    %cst = arith.constant dense<0.000000e+00> : vector<64x128xf32>
    %15 = tpu.matmul %12, %14, %cst {dimension_numbers = #tpu.dot_dimension_numbers<[1], [0], [0], [1], [0, 0, 1, 1], [], []>} : vector<64x32xf32>, vector<32x128xf32>, vector<64x128xf32> -> vector<64x128xf32>
    %c0_8 = arith.constant 0 : index
    %c0_9 = arith.constant 0 : index
    %c0_10 = arith.constant 0 : index
    %16 = vector.load %arg5[%c0_8, %c0_9, %c0_10] : memref<1x1x128xf32, #tpu.memory_space<vmem>>, vector<1x1x128xf32>
    %17 = vector.shape_cast %16 : vector<1x1x128xf32> to vector<1x128xf32>
    %18 = vector.broadcast %17 : vector<1x128xf32> to vector<64x128xf32>
    %19 = arith.addf %15, %18 : vector<64x128xf32>
    %20 = vector.shape_cast %19 : vector<64x128xf32> to vector<8x8x128xf32>
    %c0_11 = arith.constant 0 : index
    %c0_12 = arith.constant 0 : index
    %c0_13 = arith.constant 0 : index
    %21 = vector.load %arg10[%c0_11, %c0_12, %c0_13] : memref<8x8x128xf32, #tpu.memory_space<vmem>>, vector<8x8x128xf32>
    tpu.vector_store %arg10[%c0_11, %c0_12, %c0_13], %20 {strides = array<i32>} : memref<8x8x128xf32, #tpu.memory_space<vmem>>, vector<8x8x128xf32>,
    %c0_14 = arith.constant 0 : index
    %c0_15 = arith.constant 0 : index
    %c0_16 = arith.constant 0 : index
    %22 = vector.load %arg4[%c0_14, %c0_15, %c0_16] : memref<1x32x128xf32, #tpu.memory_space<vmem>>, vector<1x32x128xf32>
    %23 = vector.shape_cast %22 : vector<1x32x128xf32> to vector<32x128xf32>
    %c0_17 = arith.constant 0 : index
    %c0_18 = arith.constant 0 : index
    %24 = vector.load %arg11[%c0_17, %c0_18] : memref<8x32xf32, #tpu.memory_space<vmem>>, vector<8x32xf32>
    %c0_19 = arith.constant 0 : index
    %c0_20 = arith.constant 0 : index
    %25 = vector.load %arg12[%c0_19, %c0_20] : memref<8x32xf32, #tpu.memory_space<vmem>>, vector<8x32xf32>
    %c0_i32_21 = arith.constant 0 : i32
    %26 = arith.index_cast %c0_i32_21 : i32 to index
    %c0_22 = arith.constant 0 : index
    %c0_23 = arith.constant 0 : index
    %27 = vector.load %arg10[%26, %c0_22, %c0_23] : memref<8x8x128xf32, #tpu.memory_space<vmem>>, vector<1x8x128xf32>
    %28 = vector.shape_cast %27 : vector<1x8x128xf32> to vector<8x128xf32>
    %cst_24 = arith.constant dense<0.000000e+00> : vector<8x128xf32>
    %29 = tpu.matmul %24, %23, %cst_24 {dimension_numbers = #tpu.dot_dimension_numbers<[1], [0], [0], [1], [0, 0, 1, 1], [], []>} : vector<8x32xf32>, vector<32x128xf32>, vector<8x128xf32> -> vector<8x128xf32>
    %30 = arith.addf %28, %29 : vector<8x128xf32>
    %31 = vector.extract_strided_slice %30 {offsets = [0, 0], sizes = [8, 96], strides = [1, 1]} : vector<8x128xf32> to vector<8x96xf32>
    %32 = arith.negf %31 : vector<8x96xf32>
    %33 = math.exp %32 : vector<8x96xf32>
    %cst_25 = arith.constant 1.000000e+00 : f32
    %34 = vector.broadcast %cst_25 : f32 to vector<8x96xf32>
    %35 = arith.addf %34, %33 : vector<8x96xf32>
    %36 = arith.divf %34, %35 : vector<8x96xf32>
    %37 = vector.extract_strided_slice %36 {offsets = [0, 0], sizes = [8, 32], strides = [1, 1]} : vector<8x96xf32> to vector<8x32xf32>
    %38 = vector.extract_strided_slice %36 {offsets = [0, 32], sizes = [8, 32], strides = [1, 1]} : vector<8x96xf32> to vector<8x32xf32>
    %39 = vector.extract_strided_slice %36 {offsets = [0, 64], sizes = [8, 32], strides = [1, 1]} : vector<8x96xf32> to vector<8x32xf32>
    %40 = vector.extract_strided_slice %30 {offsets = [0, 96], sizes = [8, 32], strides = [1, 1]} : vector<8x128xf32> to vector<8x32xf32>
    %41 = math.tanh %40 : vector<8x32xf32>
    %42 = arith.mulf %38, %25 : vector<8x32xf32>
    %43 = arith.mulf %37, %41 : vector<8x32xf32>
    %44 = arith.addf %42, %43 : vector<8x32xf32>
    %45 = math.tanh %44 : vector<8x32xf32>
    %46 = arith.mulf %39, %45 : vector<8x32xf32>
    %47 = arith.addi %1, %c0_i32_21 : i32
    %48 = arith.index_cast %47 : i32 to index
    %c0_26 = arith.constant 0 : index
    %c0_27 = arith.constant 0 : index
    %49 = vector.load %arg9[%48, %c0_26, %c0_27] : memref<8x8x32xf32, #tpu.memory_space<vmem>>, vector<1x8x32xf32>
    %50 = vector.shape_cast %49 : vector<1x8x32xf32> to vector<8x32xf32>
    %51 = vector.shape_cast %46 : vector<8x32xf32> to vector<1x8x32xf32>
    tpu.vector_store %arg9[%48, %c0_26, %c0_27], %51 {strides = array<i32>} : memref<8x8x32xf32, #tpu.memory_space<vmem>>, vector<1x8x32xf32>,
    %c1_i32 = arith.constant 1 : i32
    %52 = arith.index_cast %c1_i32 : i32 to index
    %c0_28 = arith.constant 0 : index
    %c0_29 = arith.constant 0 : index
    %53 = vector.load %arg10[%52, %c0_28, %c0_29] : memref<8x8x128xf32, #tpu.memory_space<vmem>>, vector<1x8x128xf32>
    %54 = vector.shape_cast %53 : vector<1x8x128xf32> to vector<8x128xf32>
    %cst_30 = arith.constant dense<0.000000e+00> : vector<8x128xf32>
    %55 = tpu.matmul %46, %23, %cst_30 {dimension_numbers = #tpu.dot_dimension_numbers<[1], [0], [0], [1], [0, 0, 1, 1], [], []>} : vector<8x32xf32>, vector<32x128xf32>, vector<8x128xf32> -> vector<8x128xf32>
    %56 = arith.addf %54, %55 : vector<8x128xf32>
    %57 = vector.extract_strided_slice %56 {offsets = [0, 0], sizes = [8, 96], strides = [1, 1]} : vector<8x128xf32> to vector<8x96xf32>
    %58 = arith.negf %57 : vector<8x96xf32>
    %59 = math.exp %58 : vector<8x96xf32>
    %cst_31 = arith.constant 1.000000e+00 : f32
    %60 = vector.broadcast %cst_31 : f32 to vector<8x96xf32>
    %61 = arith.addf %60, %59 : vector<8x96xf32>
    %62 = arith.divf %60, %61 : vector<8x96xf32>
    %63 = vector.extract_strided_slice %62 {offsets = [0, 0], sizes = [8, 32], strides = [1, 1]} : vector<8x96xf32> to vector<8x32xf32>
    %64 = vector.extract_strided_slice %62 {offsets = [0, 32], sizes = [8, 32], strides = [1, 1]} : vector<8x96xf32> to vector<8x32xf32>
    %65 = vector.extract_strided_slice %62 {offsets = [0, 64], sizes = [8, 32], strides = [1, 1]} : vector<8x96xf32> to vector<8x32xf32>
    %66 = vector.extract_strided_slice %56 {offsets = [0, 96], sizes = [8, 32], strides = [1, 1]} : vector<8x128xf32> to vector<8x32xf32>
    %67 = math.tanh %66 : vector<8x32xf32>
    %68 = arith.mulf %64, %44 : vector<8x32xf32>
    %69 = arith.mulf %63, %67 : vector<8x32xf32>
    %70 = arith.addf %68, %69 : vector<8x32xf32>
    %71 = math.tanh %70 : vector<8x32xf32>
    %72 = arith.mulf %65, %71 : vector<8x32xf32>
    %73 = arith.addi %1, %c1_i32 : i32
    %74 = arith.index_cast %73 : i32 to index
    %c0_32 = arith.constant 0 : index
    %c0_33 = arith.constant 0 : index
    %75 = vector.load %arg9[%74, %c0_32, %c0_33] : memref<8x8x32xf32, #tpu.memory_space<vmem>>, vector<1x8x32xf32>
    %76 = vector.shape_cast %75 : vector<1x8x32xf32> to vector<8x32xf32>
    %77 = vector.shape_cast %72 : vector<8x32xf32> to vector<1x8x32xf32>
    tpu.vector_store %arg9[%74, %c0_32, %c0_33], %77 {strides = array<i32>} : memref<8x8x32xf32, #tpu.memory_space<vmem>>, vector<1x8x32xf32>,
    %c2_i32 = arith.constant 2 : i32
    %78 = arith.index_cast %c2_i32 : i32 to index
    %c0_34 = arith.constant 0 : index
    %c0_35 = arith.constant 0 : index
    %79 = vector.load %arg10[%78, %c0_34, %c0_35] : memref<8x8x128xf32, #tpu.memory_space<vmem>>, vector<1x8x128xf32>
    %80 = vector.shape_cast %79 : vector<1x8x128xf32> to vector<8x128xf32>
    %cst_36 = arith.constant dense<0.000000e+00> : vector<8x128xf32>
    %81 = tpu.matmul %72, %23, %cst_36 {dimension_numbers = #tpu.dot_dimension_numbers<[1], [0], [0], [1], [0, 0, 1, 1], [], []>} : vector<8x32xf32>, vector<32x128xf32>, vector<8x128xf32> -> vector<8x128xf32>
    %82 = arith.addf %80, %81 : vector<8x128xf32>
    %83 = vector.extract_strided_slice %82 {offsets = [0, 0], sizes = [8, 96], strides = [1, 1]} : vector<8x128xf32> to vector<8x96xf32>
    %84 = arith.negf %83 : vector<8x96xf32>
    %85 = math.exp %84 : vector<8x96xf32>
    %cst_37 = arith.constant 1.000000e+00 : f32
    %86 = vector.broadcast %cst_37 : f32 to vector<8x96xf32>
    %87 = arith.addf %86, %85 : vector<8x96xf32>
    %88 = arith.divf %86, %87 : vector<8x96xf32>
    %89 = vector.extract_strided_slice %88 {offsets = [0, 0], sizes = [8, 32], strides = [1, 1]} : vector<8x96xf32> to vector<8x32xf32>
    %90 = vector.extract_strided_slice %88 {offsets = [0, 32], sizes = [8, 32], strides = [1, 1]} : vector<8x96xf32> to vector<8x32xf32>
    %91 = vector.extract_strided_slice %88 {offsets = [0, 64], sizes = [8, 32], strides = [1, 1]} : vector<8x96xf32> to vector<8x32xf32>
    %92 = vector.extract_strided_slice %82 {offsets = [0, 96], sizes = [8, 32], strides = [1, 1]} : vector<8x128xf32> to vector<8x32xf32>
    %93 = math.tanh %92 : vector<8x32xf32>
    %94 = arith.mulf %90, %70 : vector<8x32xf32>
    %95 = arith.mulf %89, %93 : vector<8x32xf32>
    %96 = arith.addf %94, %95 : vector<8x32xf32>
    %97 = math.tanh %96 : vector<8x32xf32>
    %98 = arith.mulf %91, %97 : vector<8x32xf32>
    %99 = arith.addi %1, %c2_i32 : i32
    %100 = arith.index_cast %99 : i32 to index
    %c0_38 = arith.constant 0 : index
    %c0_39 = arith.constant 0 : index
    %101 = vector.load %arg9[%100, %c0_38, %c0_39] : memref<8x8x32xf32, #tpu.memory_space<vmem>>, vector<1x8x32xf32>
    %102 = vector.shape_cast %101 : vector<1x8x32xf32> to vector<8x32xf32>
    %103 = vector.shape_cast %98 : vector<8x32xf32> to vector<1x8x32xf32>
    tpu.vector_store %arg9[%100, %c0_38, %c0_39], %103 {strides = array<i32>} : memref<8x8x32xf32, #tpu.memory_space<vmem>>, vector<1x8x32xf32>,
    %c3_i32 = arith.constant 3 : i32
    %104 = arith.index_cast %c3_i32 : i32 to index
    %c0_40 = arith.constant 0 : index
    %c0_41 = arith.constant 0 : index
    %105 = vector.load %arg10[%104, %c0_40, %c0_41] : memref<8x8x128xf32, #tpu.memory_space<vmem>>, vector<1x8x128xf32>
    %106 = vector.shape_cast %105 : vector<1x8x128xf32> to vector<8x128xf32>
    %cst_42 = arith.constant dense<0.000000e+00> : vector<8x128xf32>
    %107 = tpu.matmul %98, %23, %cst_42 {dimension_numbers = #tpu.dot_dimension_numbers<[1], [0], [0], [1], [0, 0, 1, 1], [], []>} : vector<8x32xf32>, vector<32x128xf32>, vector<8x128xf32> -> vector<8x128xf32>
    %108 = arith.addf %106, %107 : vector<8x128xf32>
    %109 = vector.extract_strided_slice %108 {offsets = [0, 0], sizes = [8, 96], strides = [1, 1]} : vector<8x128xf32> to vector<8x96xf32>
    %110 = arith.negf %109 : vector<8x96xf32>
    %111 = math.exp %110 : vector<8x96xf32>
    %cst_43 = arith.constant 1.000000e+00 : f32
    %112 = vector.broadcast %cst_43 : f32 to vector<8x96xf32>
    %113 = arith.addf %112, %111 : vector<8x96xf32>
    %114 = arith.divf %112, %113 : vector<8x96xf32>
    %115 = vector.extract_strided_slice %114 {offsets = [0, 0], sizes = [8, 32], strides = [1, 1]} : vector<8x96xf32> to vector<8x32xf32>
    %116 = vector.extract_strided_slice %114 {offsets = [0, 32], sizes = [8, 32], strides = [1, 1]} : vector<8x96xf32> to vector<8x32xf32>
    %117 = vector.extract_strided_slice %114 {offsets = [0, 64], sizes = [8, 32], strides = [1, 1]} : vector<8x96xf32> to vector<8x32xf32>
    %118 = vector.extract_strided_slice %108 {offsets = [0, 96], sizes = [8, 32], strides = [1, 1]} : vector<8x128xf32> to vector<8x32xf32>
    %119 = math.tanh %118 : vector<8x32xf32>
    %120 = arith.mulf %116, %96 : vector<8x32xf32>
    %121 = arith.mulf %115, %119 : vector<8x32xf32>
    %122 = arith.addf %120, %121 : vector<8x32xf32>
    %123 = math.tanh %122 : vector<8x32xf32>
    %124 = arith.mulf %117, %123 : vector<8x32xf32>
    %125 = arith.addi %1, %c3_i32 : i32
    %126 = arith.index_cast %125 : i32 to index
    %c0_44 = arith.constant 0 : index
    %c0_45 = arith.constant 0 : index
    %127 = vector.load %arg9[%126, %c0_44, %c0_45] : memref<8x8x32xf32, #tpu.memory_space<vmem>>, vector<1x8x32xf32>
    %128 = vector.shape_cast %127 : vector<1x8x32xf32> to vector<8x32xf32>
    %129 = vector.shape_cast %124 : vector<8x32xf32> to vector<1x8x32xf32>
    tpu.vector_store %arg9[%126, %c0_44, %c0_45], %129 {strides = array<i32>} : memref<8x8x32xf32, #tpu.memory_space<vmem>>, vector<1x8x32xf32>,
    %c4_i32 = arith.constant 4 : i32
    %130 = arith.index_cast %c4_i32 : i32 to index
    %c0_46 = arith.constant 0 : index
    %c0_47 = arith.constant 0 : index
    %131 = vector.load %arg10[%130, %c0_46, %c0_47] : memref<8x8x128xf32, #tpu.memory_space<vmem>>, vector<1x8x128xf32>
    %132 = vector.shape_cast %131 : vector<1x8x128xf32> to vector<8x128xf32>
    %cst_48 = arith.constant dense<0.000000e+00> : vector<8x128xf32>
    %133 = tpu.matmul %124, %23, %cst_48 {dimension_numbers = #tpu.dot_dimension_numbers<[1], [0], [0], [1], [0, 0, 1, 1], [], []>} : vector<8x32xf32>, vector<32x128xf32>, vector<8x128xf32> -> vector<8x128xf32>
    %134 = arith.addf %132, %133 : vector<8x128xf32>
    %135 = vector.extract_strided_slice %134 {offsets = [0, 0], sizes = [8, 96], strides = [1, 1]} : vector<8x128xf32> to vector<8x96xf32>
    %136 = arith.negf %135 : vector<8x96xf32>
    %137 = math.exp %136 : vector<8x96xf32>
    %cst_49 = arith.constant 1.000000e+00 : f32
    %138 = vector.broadcast %cst_49 : f32 to vector<8x96xf32>
    %139 = arith.addf %138, %137 : vector<8x96xf32>
    %140 = arith.divf %138, %139 : vector<8x96xf32>
    %141 = vector.extract_strided_slice %140 {offsets = [0, 0], sizes = [8, 32], strides = [1, 1]} : vector<8x96xf32> to vector<8x32xf32>
    %142 = vector.extract_strided_slice %140 {offsets = [0, 32], sizes = [8, 32], strides = [1, 1]} : vector<8x96xf32> to vector<8x32xf32>
    %143 = vector.extract_strided_slice %140 {offsets = [0, 64], sizes = [8, 32], strides = [1, 1]} : vector<8x96xf32> to vector<8x32xf32>
    %144 = vector.extract_strided_slice %134 {offsets = [0, 96], sizes = [8, 32], strides = [1, 1]} : vector<8x128xf32> to vector<8x32xf32>
    %145 = math.tanh %144 : vector<8x32xf32>
    %146 = arith.mulf %142, %122 : vector<8x32xf32>
    %147 = arith.mulf %141, %145 : vector<8x32xf32>
    %148 = arith.addf %146, %147 : vector<8x32xf32>
    %149 = math.tanh %148 : vector<8x32xf32>
    %150 = arith.mulf %143, %149 : vector<8x32xf32>
    %151 = arith.addi %1, %c4_i32 : i32
    %152 = arith.index_cast %151 : i32 to index
    %c0_50 = arith.constant 0 : index
    %c0_51 = arith.constant 0 : index
    %153 = vector.load %arg9[%152, %c0_50, %c0_51] : memref<8x8x32xf32, #tpu.memory_space<vmem>>, vector<1x8x32xf32>
    %154 = vector.shape_cast %153 : vector<1x8x32xf32> to vector<8x32xf32>
    %155 = vector.shape_cast %150 : vector<8x32xf32> to vector<1x8x32xf32>
    tpu.vector_store %arg9[%152, %c0_50, %c0_51], %155 {strides = array<i32>} : memref<8x8x32xf32, #tpu.memory_space<vmem>>, vector<1x8x32xf32>,
    %c5_i32 = arith.constant 5 : i32
    %156 = arith.index_cast %c5_i32 : i32 to index
    %c0_52 = arith.constant 0 : index
    %c0_53 = arith.constant 0 : index
    %157 = vector.load %arg10[%156, %c0_52, %c0_53] : memref<8x8x128xf32, #tpu.memory_space<vmem>>, vector<1x8x128xf32>
    %158 = vector.shape_cast %157 : vector<1x8x128xf32> to vector<8x128xf32>
    %cst_54 = arith.constant dense<0.000000e+00> : vector<8x128xf32>
    %159 = tpu.matmul %150, %23, %cst_54 {dimension_numbers = #tpu.dot_dimension_numbers<[1], [0], [0], [1], [0, 0, 1, 1], [], []>} : vector<8x32xf32>, vector<32x128xf32>, vector<8x128xf32> -> vector<8x128xf32>
    %160 = arith.addf %158, %159 : vector<8x128xf32>
    %161 = vector.extract_strided_slice %160 {offsets = [0, 0], sizes = [8, 96], strides = [1, 1]} : vector<8x128xf32> to vector<8x96xf32>
    %162 = arith.negf %161 : vector<8x96xf32>
    %163 = math.exp %162 : vector<8x96xf32>
    %cst_55 = arith.constant 1.000000e+00 : f32
    %164 = vector.broadcast %cst_55 : f32 to vector<8x96xf32>
    %165 = arith.addf %164, %163 : vector<8x96xf32>
    %166 = arith.divf %164, %165 : vector<8x96xf32>
    %167 = vector.extract_strided_slice %166 {offsets = [0, 0], sizes = [8, 32], strides = [1, 1]} : vector<8x96xf32> to vector<8x32xf32>
    %168 = vector.extract_strided_slice %166 {offsets = [0, 32], sizes = [8, 32], strides = [1, 1]} : vector<8x96xf32> to vector<8x32xf32>
    %169 = vector.extract_strided_slice %166 {offsets = [0, 64], sizes = [8, 32], strides = [1, 1]} : vector<8x96xf32> to vector<8x32xf32>
    %170 = vector.extract_strided_slice %160 {offsets = [0, 96], sizes = [8, 32], strides = [1, 1]} : vector<8x128xf32> to vector<8x32xf32>
    %171 = math.tanh %170 : vector<8x32xf32>
    %172 = arith.mulf %168, %148 : vector<8x32xf32>
    %173 = arith.mulf %167, %171 : vector<8x32xf32>
    %174 = arith.addf %172, %173 : vector<8x32xf32>
    %175 = math.tanh %174 : vector<8x32xf32>
    %176 = arith.mulf %169, %175 : vector<8x32xf32>
    %177 = arith.addi %1, %c5_i32 : i32
    %178 = arith.index_cast %177 : i32 to index
    %c0_56 = arith.constant 0 : index
    %c0_57 = arith.constant 0 : index
    %179 = vector.load %arg9[%178, %c0_56, %c0_57] : memref<8x8x32xf32, #tpu.memory_space<vmem>>, vector<1x8x32xf32>
    %180 = vector.shape_cast %179 : vector<1x8x32xf32> to vector<8x32xf32>
    %181 = vector.shape_cast %176 : vector<8x32xf32> to vector<1x8x32xf32>
    tpu.vector_store %arg9[%178, %c0_56, %c0_57], %181 {strides = array<i32>} : memref<8x8x32xf32, #tpu.memory_space<vmem>>, vector<1x8x32xf32>,
    %c6_i32 = arith.constant 6 : i32
    %182 = arith.index_cast %c6_i32 : i32 to index
    %c0_58 = arith.constant 0 : index
    %c0_59 = arith.constant 0 : index
    %183 = vector.load %arg10[%182, %c0_58, %c0_59] : memref<8x8x128xf32, #tpu.memory_space<vmem>>, vector<1x8x128xf32>
    %184 = vector.shape_cast %183 : vector<1x8x128xf32> to vector<8x128xf32>
    %cst_60 = arith.constant dense<0.000000e+00> : vector<8x128xf32>
    %185 = tpu.matmul %176, %23, %cst_60 {dimension_numbers = #tpu.dot_dimension_numbers<[1], [0], [0], [1], [0, 0, 1, 1], [], []>} : vector<8x32xf32>, vector<32x128xf32>, vector<8x128xf32> -> vector<8x128xf32>
    %186 = arith.addf %184, %185 : vector<8x128xf32>
    %187 = vector.extract_strided_slice %186 {offsets = [0, 0], sizes = [8, 96], strides = [1, 1]} : vector<8x128xf32> to vector<8x96xf32>
    %188 = arith.negf %187 : vector<8x96xf32>
    %189 = math.exp %188 : vector<8x96xf32>
    %cst_61 = arith.constant 1.000000e+00 : f32
    %190 = vector.broadcast %cst_61 : f32 to vector<8x96xf32>
    %191 = arith.addf %190, %189 : vector<8x96xf32>
    %192 = arith.divf %190, %191 : vector<8x96xf32>
    %193 = vector.extract_strided_slice %192 {offsets = [0, 0], sizes = [8, 32], strides = [1, 1]} : vector<8x96xf32> to vector<8x32xf32>
    %194 = vector.extract_strided_slice %192 {offsets = [0, 32], sizes = [8, 32], strides = [1, 1]} : vector<8x96xf32> to vector<8x32xf32>
    %195 = vector.extract_strided_slice %192 {offsets = [0, 64], sizes = [8, 32], strides = [1, 1]} : vector<8x96xf32> to vector<8x32xf32>
    %196 = vector.extract_strided_slice %186 {offsets = [0, 96], sizes = [8, 32], strides = [1, 1]} : vector<8x128xf32> to vector<8x32xf32>
    %197 = math.tanh %196 : vector<8x32xf32>
    %198 = arith.mulf %194, %174 : vector<8x32xf32>
    %199 = arith.mulf %193, %197 : vector<8x32xf32>
    %200 = arith.addf %198, %199 : vector<8x32xf32>
    %201 = math.tanh %200 : vector<8x32xf32>
    %202 = arith.mulf %195, %201 : vector<8x32xf32>
    %203 = arith.addi %1, %c6_i32 : i32
    %204 = arith.index_cast %203 : i32 to index
    %c0_62 = arith.constant 0 : index
    %c0_63 = arith.constant 0 : index
    %205 = vector.load %arg9[%204, %c0_62, %c0_63] : memref<8x8x32xf32, #tpu.memory_space<vmem>>, vector<1x8x32xf32>
    %206 = vector.shape_cast %205 : vector<1x8x32xf32> to vector<8x32xf32>
    %207 = vector.shape_cast %202 : vector<8x32xf32> to vector<1x8x32xf32>
    tpu.vector_store %arg9[%204, %c0_62, %c0_63], %207 {strides = array<i32>} : memref<8x8x32xf32, #tpu.memory_space<vmem>>, vector<1x8x32xf32>,
    %c7_i32 = arith.constant 7 : i32
    %208 = arith.index_cast %c7_i32 : i32 to index
    %c0_64 = arith.constant 0 : index
    %c0_65 = arith.constant 0 : index
    %209 = vector.load %arg10[%208, %c0_64, %c0_65] : memref<8x8x128xf32, #tpu.memory_space<vmem>>, vector<1x8x128xf32>
    %210 = vector.shape_cast %209 : vector<1x8x128xf32> to vector<8x128xf32>
    %cst_66 = arith.constant dense<0.000000e+00> : vector<8x128xf32>
    %211 = tpu.matmul %202, %23, %cst_66 {dimension_numbers = #tpu.dot_dimension_numbers<[1], [0], [0], [1], [0, 0, 1, 1], [], []>} : vector<8x32xf32>, vector<32x128xf32>, vector<8x128xf32> -> vector<8x128xf32>
    %212 = arith.addf %210, %211 : vector<8x128xf32>
    %213 = vector.extract_strided_slice %212 {offsets = [0, 0], sizes = [8, 96], strides = [1, 1]} : vector<8x128xf32> to vector<8x96xf32>
    %214 = arith.negf %213 : vector<8x96xf32>
    %215 = math.exp %214 : vector<8x96xf32>
    %cst_67 = arith.constant 1.000000e+00 : f32
    %216 = vector.broadcast %cst_67 : f32 to vector<8x96xf32>
    %217 = arith.addf %216, %215 : vector<8x96xf32>
    %218 = arith.divf %216, %217 : vector<8x96xf32>
    %219 = vector.extract_strided_slice %218 {offsets = [0, 0], sizes = [8, 32], strides = [1, 1]} : vector<8x96xf32> to vector<8x32xf32>
    %220 = vector.extract_strided_slice %218 {offsets = [0, 32], sizes = [8, 32], strides = [1, 1]} : vector<8x96xf32> to vector<8x32xf32>
    %221 = vector.extract_strided_slice %218 {offsets = [0, 64], sizes = [8, 32], strides = [1, 1]} : vector<8x96xf32> to vector<8x32xf32>
    %222 = vector.extract_strided_slice %212 {offsets = [0, 96], sizes = [8, 32], strides = [1, 1]} : vector<8x128xf32> to vector<8x32xf32>
    %223 = math.tanh %222 : vector<8x32xf32>
    %224 = arith.mulf %220, %200 : vector<8x32xf32>
    %225 = arith.mulf %219, %223 : vector<8x32xf32>
    %226 = arith.addf %224, %225 : vector<8x32xf32>
    %227 = math.tanh %226 : vector<8x32xf32>
    %228 = arith.mulf %221, %227 : vector<8x32xf32>
    %229 = arith.addi %1, %c7_i32 : i32
    %230 = arith.index_cast %229 : i32 to index
    %c0_68 = arith.constant 0 : index
    %c0_69 = arith.constant 0 : index
    %231 = vector.load %arg9[%230, %c0_68, %c0_69] : memref<8x8x32xf32, #tpu.memory_space<vmem>>, vector<1x8x32xf32>
    %232 = vector.shape_cast %231 : vector<1x8x32xf32> to vector<8x32xf32>
    %233 = vector.shape_cast %228 : vector<8x32xf32> to vector<1x8x32xf32>
    tpu.vector_store %arg9[%230, %c0_68, %c0_69], %233 {strides = array<i32>} : memref<8x8x32xf32, #tpu.memory_space<vmem>>, vector<1x8x32xf32>,
    %c8_i32_70 = arith.constant 8 : i32
    %c0_71 = arith.constant 0 : index
    %c0_72 = arith.constant 0 : index
    %234 = vector.load %arg11[%c0_71, %c0_72] : memref<8x32xf32, #tpu.memory_space<vmem>>, vector<8x32xf32>
    tpu.vector_store %arg11[%c0_71, %c0_72], %228 {strides = array<i32>} : memref<8x32xf32, #tpu.memory_space<vmem>>, vector<8x32xf32>,
    %c0_73 = arith.constant 0 : index
    %c0_74 = arith.constant 0 : index
    %235 = vector.load %arg12[%c0_73, %c0_74] : memref<8x32xf32, #tpu.memory_space<vmem>>, vector<8x32xf32>
    tpu.vector_store %arg12[%c0_73, %c0_74], %226 {strides = array<i32>} : memref<8x32xf32, #tpu.memory_space<vmem>>, vector<8x32xf32>,
    %c0_i32_75 = arith.constant 0 : i32
    %236 = arith.cmpi eq, %arg1, %c0_i32_75 : i32
    %237 = arith.extui %236 : i1 to i32
    %c0_i32_76 = arith.constant 0 : i32
    %238 = arith.cmpi ne, %237, %c0_i32_76 : i32
    scf.if %238 {
      %c0_77 = arith.constant 0 : index
      %c0_78 = arith.constant 0 : index
      %239 = vector.load %arg6[%c0_77, %c0_78] : memref<32x4xf32, #tpu.memory_space<vmem>>, vector<32x4xf32>
      %cst_79 = arith.constant dense<0.000000e+00> : vector<8x4xf32>
      %240 = tpu.matmul %228, %239, %cst_79 {dimension_numbers = #tpu.dot_dimension_numbers<[1], [0], [0], [1], [0, 0, 1, 1], [], []>} : vector<8x32xf32>, vector<32x4xf32>, vector<8x4xf32> -> vector<8x4xf32>
      %c0_80 = arith.constant 0 : index
      %c0_81 = arith.constant 0 : index
      %241 = vector.load %arg7[%c0_80, %c0_81] : memref<1x4xf32, #tpu.memory_space<vmem>>, vector<1x4xf32>
      %242 = vector.broadcast %241 : vector<1x4xf32> to vector<8x4xf32>
      %243 = arith.addf %240, %242 : vector<8x4xf32>
      %c0_82 = arith.constant 0 : index
      %c0_83 = arith.constant 0 : index
      %c0_84 = arith.constant 0 : index
      %244 = vector.load %arg8[%c0_82, %c0_83, %c0_84] : memref<1x8x4xf32, #tpu.memory_space<vmem>>, vector<1x8x4xf32>
      %245 = vector.shape_cast %244 : vector<1x8x4xf32> to vector<8x4xf32>
      %246 = vector.shape_cast %243 : vector<8x4xf32> to vector<1x8x4xf32>
      tpu.vector_store %arg8[%c0_82, %c0_83, %c0_84], %246 {strides = array<i32>} : memref<1x8x4xf32, #tpu.memory_space<vmem>>, vector<1x8x4xf32>,
    } else {
    }
    return
  }
  func.func @transform_1(%arg0: i32, %arg1: i32) -> (i32, i32, i32) {
    %c0_i32 = arith.constant 0 : i32
    %c0_i32_0 = arith.constant 0 : i32
    %c0_i32_1 = arith.constant 0 : i32
    return %arg0, %c0_i32, %c0_i32_0 : i32, i32, i32
  }
  func.func @transform_2(%arg0: i32, %arg1: i32) -> (i32, i32, i32) {
    %c0_i32 = arith.constant 0 : i32
    %c0_i32_0 = arith.constant 0 : i32
    %c0_i32_1 = arith.constant 0 : i32
    return %arg0, %c0_i32, %c0_i32_0 : i32, i32, i32
  }
  func.func @transform_3(%arg0: i32, %arg1: i32) -> (i32, i32, i32) {
    %c0_i32 = arith.constant 0 : i32
    %c0_i32_0 = arith.constant 0 : i32
    %c0_i32_1 = arith.constant 0 : i32
    return %arg0, %c0_i32, %c0_i32_0 : i32, i32, i32
  }
  func.func @transform_4(%arg0: i32, %arg1: i32) -> (i32, i32) {
    %c0_i32 = arith.constant 0 : i32
    %c0_i32_0 = arith.constant 0 : i32
    %c0_i32_1 = arith.constant 0 : i32
    return %c0_i32, %c0_i32_0 : i32, i32
  }
  func.func @transform_5(%arg0: i32, %arg1: i32) -> (i32, i32) {
    %c0_i32 = arith.constant 0 : i32
    %c0_i32_0 = arith.constant 0 : i32
    %c0_i32_1 = arith.constant 0 : i32
    return %c0_i32, %c0_i32_0 : i32, i32
  }
  func.func @transform_6(%arg0: i32, %arg1: i32) -> (i32, i32, i32) {
    %c0_i32 = arith.constant 0 : i32
    %c0_i32_0 = arith.constant 0 : i32
    %c0_i32_1 = arith.constant 0 : i32
    return %arg0, %c0_i32, %c0_i32_0 : i32, i32, i32
  }
}

</mosaic_0001>

<llo_original>
// kernel: tpu_custom_call.1
$region0: #{tpu_custom_call.1}
  #allocation0 [shape = 'u32[]', space=smem, size = 0x4, offset = 0x4, fixed_abs, tag = 'smem constant byte address 0x4 - core index']
  #allocation1 [shape = 'u32[144,128]{1,0:T(1,128)}', space=vmem, size = 0x12000, scoped, tag = 'internal scratch']
  #allocation2 [shape = 'f32[8,8,32]{2,1,0:T(8,128)}', space=vmem, size = 0x8000, scoped, tag = 'scratch operand']
  #allocation3 [shape = 'f32[8,8,128]{2,1,0:T(8,128)}', space=vmem, size = 0x8000, scoped, tag = 'scratch operand']
  #allocation4 [shape = 'f32[8,32]{1,0:T(8,128)}', space=vmem, size = 0x1000, scoped, tag = 'scratch operand']
  #allocation5 [shape = 'f32[8,32]{1,0:T(8,128)}', space=vmem, size = 0x1000, scoped, tag = 'scratch operand']
  #allocation6 [shape = 's32[1]{0}', space=sflag, size = 0x4, scoped, tag = 'scratch operand']
  #allocation11 [shape = 's32[]', space=sflag, size = 0x4, offset = 0, fixed_abs, tag = 'sflag constant byte address 0x0 - dummy sync flag']
  #allocation12 [shape = 's32[]', space=sflag, size = 0x4, offset = 0, fixed_abs, tag = 'sflag constant byte address 0x0 - dummy sync flag']
  #allocation13 [shape = 'u32[]', space=smem, size = 0x4, offset = 0x44, fixed_abs, tag = 'smem constant byte address 0x44 - assertion arg 0']
  #allocation14 [shape = 'u32[]', space=smem, size = 0x4, offset = 0x48, fixed_abs, tag = 'smem constant byte address 0x48 - assertion arg 1']
  %s0 = inlined_call_operand.hbm [shape: f32[8,8,32], index: 0, kind: input, shape index: {}]
  %s1 = inlined_call_operand.hbm [shape: f32[2,32,128], index: 1, kind: input, shape index: {}]
  %s2 = inlined_call_operand.hbm [shape: f32[2,32,128], index: 2, kind: input, shape index: {}]
  %s3 = inlined_call_operand.vmem [shape: f32[2,1,128], index: 3, kind: input, shape index: {}]
  %s4 = inlined_call_operand.vmem [shape: f32[32,4], index: 4, kind: input, shape index: {}]
  %s5 = inlined_call_operand.vmem [shape: f32[1,4], index: 5, kind: input, shape index: {}]
  %s6 = inlined_call_operand.vmem [shape: f32[2,8,4], index: 6, kind: output, shape index: {}]
  %s7 = sld [smem:[#allocation0]]
  $region77: #{tpu_custom_call.1} parent=0
    _
  %s9 = ssub.s32 1, %s7
  %s10 = scalar_select 0, %s9, %s7
  $region1: #{tpu_custom_call.1} parent=0
    #allocation7 [shape = 'u8[32768]{0}', space=vmem, size = 0x8000, scoped, tag = 'input window, operand 1']
    #allocation8 [shape = 's32[2]{0}', space=sflag, size = 0x8, scoped, tag = 'scoped memory for tpu_custom_call.1']
    #allocation9 [shape = 'u8[32768]{0}', space=vmem, size = 0x8000, scoped, tag = 'input window, operand 2']
    #allocation10 [shape = 's32[2]{0}', space=sflag, size = 0x8, scoped, tag = 'scoped memory for tpu_custom_call.1']
    %11 = vsyncpa [#allocation8], 0
    %s12 = scalar_lea.sflag [#allocation8], 1
    %13 = vsyncpa %s12, 0
    %14 = vsyncpa [#allocation10], 0
    %s15 = scalar_lea.sflag [#allocation10], 1
    %16 = vsyncpa %s15, 0
    loop: start=0, step=1, limit=4
    $region2: #{tpu_custom_call.1} parent=1 // loop_pre_header
      _
    $region3: #{tpu_custom_call.1} parent=1 // loop_header
      %s18 = sphi 0, %s22
      %p19 = scmp.ge.s32.totalorder %s18, 4
      %s25 = sphi 0, %s37
      %s26 = sphi 0, %s33
      %s27 = sphi 0, %s25
      %s28 = sphi 0, %s26
      %s29 = sphi 0, %s27
      %s30 = sphi 0, %s28
      %s40 = sphi 0, %s42
      %s43 = sphi 0, %s40
      %s44 = sphi 0, %s43
      %s60 = sphi 0, %s44
      %s66 = sphi 0, %s68
      %s69 = sphi 0, %s66
      %s70 = sphi 0, %s69
      %s86 = sphi 0, %s70
      %s92 = sphi 0, %s94
      %s95 = sphi 0, %s92
      %s96 = sphi 0, %s95
      %s112 = sphi 0, %s96
      %s116 = sphi 0, %s116
      %s118 = sphi 0, %s116
      %s119 = sphi 0, %s118
      %s133 = sphi 0, %s119
      %s137 = sphi 0, %s137
      %s139 = sphi 0, %s137
      %s140 = sphi 0, %s139
      %s154 = sphi 0, %s140
      %s160 = sphi 0, %s162
      %s163 = sphi 0, %s160
      %s164 = sphi 0, %s163
      %s180 = sphi 0, %s164
    $region4: #{tpu_custom_call.1} parent=1 // loop_header_branch
      %21 = sbr.rel (%p19) target = $region8
    $region5: #{tpu_custom_call.1} parent=1 // loop_body
      %s23 = ssub.s32 %s18, 1
      %s24 = ssub.s32 %s18, 2
      %s31 = sadd.s32 1, %s26
      %p32 = scmp.ge.s32.totalorder %s31, 1
      %s33 = scalar_select %p32, 0, %s31
      %s34 = sadd.s32 1, %s25
      %s35 = scalar_select %p32, %s34, %s25
      %p36 = scmp.ge.s32.totalorder %s35, 2
      %s37 = scalar_select %p36, 0, %s35
      %s38 = ssub.s32 %s25, %s37
      %p39 = scmp.eq.s32.totalorder %s38, 0
      %s41 = sadd.s32 %s40, 1
      %s42 = scalar_select %p39, %s40, %s41
      %p45 = pneg %p39
      %p46 = scmp.eq.s32.totalorder %s18, 1
      %p47 = por %p45, %p46
      %p48 = scmp.ne.s32.totalorder %s40, %s43
      %p49 = scmp.eq.s32.totalorder %s18, 0
      %p50 = por %p48, %p49
      %p51 = scmp.ne.s32.totalorder %s40, %s43
      %p52 = scmp.eq.s32.totalorder %s23, 1
      %p53 = por %p51, %p52
      %p54 = scmp.ne.s32.totalorder %s43, %s44
      %p55 = scmp.eq.s32.totalorder %s23, 0
      %p56 = por %p54, %p55
      %p57 = scmp.ne.s32.totalorder %s43, %s44
      %p58 = scmp.eq.s32.totalorder %s24, 1
      %p59 = por %p57, %p58
      %p61 = scmp.ne.s32.totalorder %s44, %s60
      %p62 = scmp.eq.s32.totalorder %s24, 0
      %p63 = por %p61, %p62
      %s64 = ssub.s32 %s25, %s37
      %p65 = scmp.eq.s32.totalorder %s64, 0
      %s67 = sadd.s32 %s66, 1
      %s68 = scalar_select %p65, %s66, %s67
      %p71 = pneg %p65
      %p72 = scmp.eq.s32.totalorder %s18, 1
      %p73 = por %p71, %p72
      %p74 = scmp.ne.s32.totalorder %s66, %s69
      %p75 = scmp.eq.s32.totalorder %s18, 0
      %p76 = por %p74, %p75
      %p77 = scmp.ne.s32.totalorder %s66, %s69
      %p78 = scmp.eq.s32.totalorder %s23, 1
      %p79 = por %p77, %p78
      %p80 = scmp.ne.s32.totalorder %s69, %s70
      %p81 = scmp.eq.s32.totalorder %s23, 0
      %p82 = por %p80, %p81
      %p83 = scmp.ne.s32.totalorder %s69, %s70
      %p84 = scmp.eq.s32.totalorder %s24, 1
      %p85 = por %p83, %p84
      %p87 = scmp.ne.s32.totalorder %s70, %s86
      %p88 = scmp.eq.s32.totalorder %s24, 0
      %p89 = por %p87, %p88
      %s90 = ssub.s32 %s25, %s37
      %p91 = scmp.eq.s32.totalorder %s90, 0
      %s93 = sadd.s32 %s92, 1
      %s94 = scalar_select %p91, %s92, %s93
      %p97 = pneg %p91
      %p98 = scmp.eq.s32.totalorder %s18, 1
      %p99 = por %p97, %p98
      %p100 = scmp.ne.s32.totalorder %s92, %s95
      %p101 = scmp.eq.s32.totalorder %s18, 0
      %p102 = por %p100, %p101
      %p103 = scmp.ne.s32.totalorder %s92, %s95
      %p104 = scmp.eq.s32.totalorder %s23, 1
      %p105 = por %p103, %p104
      %p106 = scmp.ne.s32.totalorder %s95, %s96
      %p107 = scmp.eq.s32.totalorder %s23, 0
      %p108 = por %p106, %p107
      %p109 = scmp.ne.s32.totalorder %s95, %s96
      %p110 = scmp.eq.s32.totalorder %s24, 1
      %p111 = por %p109, %p110
      %p113 = scmp.ne.s32.totalorder %s96, %s112
      %p114 = scmp.eq.s32.totalorder %s24, 0
      %p115 = por %p113, %p114
      %s117 = sadd.s32 %s116, 1
      %p120 = scmp.eq.s32.totalorder %s18, 1
      %p121 = scmp.ne.s32.totalorder %s116, %s118
      %p122 = scmp.eq.s32.totalorder %s18, 0
      %p123 = por %p121, %p122
      %p124 = scmp.ne.s32.totalorder %s116, %s118
      %p125 = scmp.eq.s32.totalorder %s23, 1
      %p126 = por %p124, %p125
      %p127 = scmp.ne.s32.totalorder %s118, %s119
      %p128 = scmp.eq.s32.totalorder %s23, 0
      %p129 = por %p127, %p128
      %p130 = scmp.ne.s32.totalorder %s118, %s119
      %p131 = scmp.eq.s32.totalorder %s24, 1
      %p132 = por %p130, %p131
      %p134 = scmp.ne.s32.totalorder %s119, %s133
      %p135 = scmp.eq.s32.totalorder %s24, 0
      %p136 = por %p134, %p135
      %s138 = sadd.s32 %s137, 1
      %p141 = scmp.eq.s32.totalorder %s18, 1
      %p142 = scmp.ne.s32.totalorder %s137, %s139
      %p143 = scmp.eq.s32.totalorder %s18, 0
      %p144 = por %p142, %p143
      %p145 = scmp.ne.s32.totalorder %s137, %s139
      %p146 = scmp.eq.s32.totalorder %s23, 1
      %p147 = por %p145, %p146
      %p148 = scmp.ne.s32.totalorder %s139, %s140
      %p149 = scmp.eq.s32.totalorder %s23, 0
      %p150 = por %p148, %p149
      %p151 = scmp.ne.s32.totalorder %s139, %s140
      %p152 = scmp.eq.s32.totalorder %s24, 1
      %p153 = por %p151, %p152
      %p155 = scmp.ne.s32.totalorder %s140, %s154
      %p156 = scmp.eq.s32.totalorder %s24, 0
      %p157 = por %p155, %p156
      %s158 = ssub.s32 %s25, %s37
      %p159 = scmp.eq.s32.totalorder %s158, 0
      %s161 = sadd.s32 %s160, 1
      %s162 = scalar_select %p159, %s160, %s161
      %p165 = pneg %p159
      %p166 = scmp.eq.s32.totalorder %s18, 1
      %p167 = por %p165, %p166
      %p168 = scmp.ne.s32.totalorder %s160, %s163
      %p169 = scmp.eq.s32.totalorder %s18, 0
      %p170 = por %p168, %p169
      %p171 = scmp.ne.s32.totalorder %s160, %s163
      %p172 = scmp.eq.s32.totalorder %s23, 1
      %p173 = por %p171, %p172
      %p174 = scmp.ne.s32.totalorder %s163, %s164
      %p175 = scmp.eq.s32.totalorder %s23, 0
      %p176 = por %p174, %p175
      %p177 = scmp.ne.s32.totalorder %s163, %s164
      %p178 = scmp.eq.s32.totalorder %s24, 1
      %p179 = por %p177, %p178
      %p181 = scmp.ne.s32.totalorder %s164, %s180
      %p182 = scmp.eq.s32.totalorder %s24, 0
      %p183 = por %p181, %p182
      %p184 = scmp.le.s32.totalorder 1, %s18
      %p185 = scmp.lt.s32.totalorder %s18, 3
      %p186 = pnand %p184, %p185
      %p187 = pneg %p186
      // Predicated region
      $region9: #{tpu_custom_call.1} parent=5 // pred_check
        _
      $region10: #{tpu_custom_call.1} parent=5 // pred_check_branch
        %189 = sbr.rel (%p186) target = $region12
      $region11: #{tpu_custom_call.1} parent=5 // pred_region
        %s190 = ssub.s32 %s18, 1
        // Predicated region
        $region13: #{tpu_custom_call.1} parent=11 // pred_check
          %p191 = pneg %p129
        $region14: #{tpu_custom_call.1} parent=11 // pred_check_branch
          %193 = sbr.rel (%p191) target = $region16
        $region15: #{tpu_custom_call.1} parent=11 // pred_region
          _
        $region16: #{tpu_custom_call.1} parent=11 // pred_fallthru
          _
        // Predicated region
        $region17: #{tpu_custom_call.1} parent=11 // pred_check
          %p194 = pneg %p150
        $region18: #{tpu_custom_call.1} parent=11 // pred_check_branch
          %196 = sbr.rel (%p194) target = $region20
        $region19: #{tpu_custom_call.1} parent=11 // pred_region
          _
        $region20: #{tpu_custom_call.1} parent=11 // pred_fallthru
          _
      $region12: #{tpu_custom_call.1} parent=5 // pred_fallthru
        _
      %p197 = scmp.lt.s32.totalorder %s18, 2
      // Predicated region
      $region21: #{tpu_custom_call.1} parent=5 // pred_check
        %p198 = pneg %p197
      $region22: #{tpu_custom_call.1} parent=5 // pred_check_branch
        %200 = sbr.rel (%p198) target = $region24
      $region23: #{tpu_custom_call.1} parent=5 // pred_region
        // Predicated region
        $region25: #{tpu_custom_call.1} parent=23 // pred_check
          %p201 = pneg %p50
        $region26: #{tpu_custom_call.1} parent=23 // pred_check_branch
          %203 = sbr.rel (%p201) target = $region28
        $region27: #{tpu_custom_call.1} parent=23 // pred_region
          %s204 = sand.u32 %s40, 1
          %s205 = scalar_lea.sflag [#allocation8], %s204
          %s206 = sand.u32 %s40, 1
          %s207 = smul.addr %s206, 32
          %s208 = scalar_lea.vmem [#allocation7], %s207
          %s210 = ssub.s32 512, 512
          %211 = vsyncadd %s205, %s210
          %s212 = smul.addr %s25, 4
          %s213 = smul.addr %s212, 128
          %s214 = scalar_lea.hbm %s1, %s213
          %s215 = sshll.u32 %s208, 4
          %s216 = int_to_ptr.vmem [resolvable:$true] %s215
          %221 = dma.hbm_to_vmem [thread:$0]  %s214, 512, %s216, %s205, 128, 128, 8
        $region28: #{tpu_custom_call.1} parent=23 // pred_fallthru
          _
        // Predicated region
        $region29: #{tpu_custom_call.1} parent=23 // pred_check
          %p222 = pneg %p76
        $region30: #{tpu_custom_call.1} parent=23 // pred_check_branch
          %224 = sbr.rel (%p222) target = $region32
        $region31: #{tpu_custom_call.1} parent=23 // pred_region
          %s225 = sand.u32 %s66, 1
          %s226 = scalar_lea.sflag [#allocation10], %s225
          %s227 = sand.u32 %s66, 1
          %s228 = smul.addr %s227, 32
          %s229 = scalar_lea.vmem [#allocation9], %s228
          %s231 = ssub.s32 512, 512
          %232 = vsyncadd %s226, %s231
          %s233 = smul.addr %s25, 4
          %s234 = smul.addr %s233, 128
          %s235 = scalar_lea.hbm %s2, %s234
          %s236 = sshll.u32 %s229, 4
          %s237 = int_to_ptr.vmem [resolvable:$true] %s236
          %242 = dma.hbm_to_vmem [thread:$0]  %s235, 512, %s237, %s226, 128, 128, 8
        $region32: #{tpu_custom_call.1} parent=23 // pred_fallthru
          _
        // Predicated region
        $region33: #{tpu_custom_call.1} parent=23 // pred_check
          %p243 = pneg %p102
        $region34: #{tpu_custom_call.1} parent=23 // pred_check_branch
          %245 = sbr.rel (%p243) target = $region36
        $region35: #{tpu_custom_call.1} parent=23 // pred_region
          %p246 = scmp.lt.s32.totalorder %s25, 1
          %s247 = scalar_select %p246, %s25, 1
          %s248 = scalar_lea.vmem %s3, %s247
        $region36: #{tpu_custom_call.1} parent=23 // pred_fallthru
          _
      $region24: #{tpu_custom_call.1} parent=5 // pred_fallthru
        _
      %p249 = scmp.le.s32.totalorder 1, %s18
      %p250 = scmp.lt.s32.totalorder %s18, 3
      %p251 = pnand %p249, %p250
      %p252 = pneg %p251
      // Predicated region
      $region37: #{tpu_custom_call.1} parent=5 // pred_check
        _
      $region38: #{tpu_custom_call.1} parent=5 // pred_check_branch
        %254 = sbr.rel (%p251) target = $region40
      $region39: #{tpu_custom_call.1} parent=5 // pred_region
        %s255 = ssub.s32 %s18, 1
        %s256 = sand.u32 %s43, 1
        %s257 = scalar_lea.sflag [#allocation8], %s256
        %s258 = sand.u32 %s43, 1
        %s259 = smul.addr %s258, 32
        %s260 = scalar_lea.vmem [#allocation7], %s259
        // Predicated region
        $region41: #{tpu_custom_call.1} parent=39 // pred_check
          %p261 = pneg %p56
        $region42: #{tpu_custom_call.1} parent=39 // pred_check_branch
          %263 = sbr.rel (%p261) target = $region44
        $region43: #{tpu_custom_call.1} parent=39 // pred_region
          %264 = dma.done %s257, 512
        $region44: #{tpu_custom_call.1} parent=39 // pred_fallthru
          _
        %s265 = sand.u32 %s69, 1
        %s266 = scalar_lea.sflag [#allocation10], %s265
        %s267 = sand.u32 %s69, 1
        %s268 = smul.addr %s267, 32
        %s269 = scalar_lea.vmem [#allocation9], %s268
        // Predicated region
        $region45: #{tpu_custom_call.1} parent=39 // pred_check
          %p270 = pneg %p82
        $region46: #{tpu_custom_call.1} parent=39 // pred_check_branch
          %272 = sbr.rel (%p270) target = $region48
        $region47: #{tpu_custom_call.1} parent=39 // pred_region
          %273 = dma.done %s266, 512
        $region48: #{tpu_custom_call.1} parent=39 // pred_fallthru
          _
        %s274 = sand.u32 %s43, 1
        %s275 = scalar_lea.sflag [#allocation8], %s274
        %s276 = sand.u32 %s43, 1
        %s277 = smul.addr %s276, 32
        %s278 = scalar_lea.vmem [#allocation7], %s277
        %p279 = pneg %p56
        %p280 = pneg %p53
        %s281 = sand.u32 %s69, 1
        %s282 = scalar_lea.sflag [#allocation10], %s281
        %s283 = sand.u32 %s69, 1
        %s284 = smul.addr %s283, 32
        %s285 = scalar_lea.vmem [#allocation9], %s284
        %p286 = pneg %p82
        %p287 = pneg %p79
        %p288 = scmp.lt.s32.totalorder %s27, 1
        %s289 = scalar_select %p288, %s27, 1
        %s290 = scalar_lea.vmem %s3, %s289
        %p291 = pneg %p108
        %p292 = pneg %p105
        %p293 = pneg %p129
        %p294 = pneg %p126
        %p295 = pneg %p150
        %p296 = pneg %p147
        %p297 = pneg %p176
        %p298 = pneg %p173
        %p299 = scmp.lt.s32.totalorder %s27, 1
        %s300 = scalar_select %p299, %s27, 1
        %s301 = smul.addr %s300, 8
        %s302 = scalar_lea.vmem %s6, %s301
        %p303 = scmp.lt.s32.totalorder %s27, 1
        %s304 = scalar_select %p303, %s27, 1
        %s305 = scalar_lea.vmem %s3, %s304
        %p306 = scmp.lt.s32.totalorder %s27, 1
        %s307 = scalar_select %p306, %s27, 1
        %s308 = smul.addr %s307, 8
        %s309 = scalar_lea.vmem %s6, %s308
        %s310 = smul.u32 %s28, 8
        %p311 = scmp.eq.s32.totalorder %s27, 0
        %p312 = scmp.eq.s32.totalorder %s28, 0
        %p313 = pnand %p311, %p312
        %p314 = pneg %p313
        // Predicated region
        $region49: #{tpu_custom_call.1} parent=39 // pred_check
          _
        $region50: #{tpu_custom_call.1} parent=39 // pred_check_branch
          %316 = sbr.rel (%p313) target = $region52
        $region51: #{tpu_custom_call.1} parent=39 // pred_region
          // Predicated region
          $region53: #{tpu_custom_call.1} parent=51 // pred_check
            _
          $region54: #{tpu_custom_call.1} parent=51 // pred_check_branch
            %318 = sbr.rel target = $region56
          $region55: #{tpu_custom_call.1} parent=51 // pred_region
            %319 = sst [smem:[#allocation13]] [#allocation12]
            %320 = sst [smem:[#allocation14]] [#allocation11]
          $region56: #{tpu_custom_call.1} parent=51 // pred_fallthru
            _
          %322 = shalt.err (0)
          %s324 = sshll.u32 [#allocation2], 4
          %s325 = int_to_ptr.vmem [resolvable:$true] %s324
          %327 = dma.hbm_to_vmem [thread:$0]  %s0, 1024, %s325, [#allocation6]
          %s328 = smul.u32 8, 8
          %s329 = smul.u32 %s328, 1
          %s330 = sshll.u32 %s329, 4
          %331 = dma.done [#allocation6], %s330
        $region52: #{tpu_custom_call.1} parent=39 // pred_fallthru
          _
        // Predicated region
        $region57: #{tpu_custom_call.1} parent=39 // pred_check
          %p332 = pneg %p312
        $region58: #{tpu_custom_call.1} parent=39 // pred_check_branch
          %334 = sbr.rel (%p332) target = $region60
        $region59: #{tpu_custom_call.1} parent=39 // pred_region
          %vm335 = vcmask 261120
          %336 = vst.msk [vmem:[#allocation4] sm:$0xff] %vm335, 0.0
          %337 = vst.msk [vmem:[#allocation5] sm:$0xff] %vm335, 0.0
        $region60: #{tpu_custom_call.1} parent=39 // pred_fallthru
          _
        %s338 = smul.u32 %s310, 8
        %s339 = scalar_lea.vmem [#allocation2], %s338
        %v340 = vld [vmem:[%s339] sm:$0xff]
        %v341 = vld [vmem:[%s339 + $0x8] sm:$0xff]
        %v342 = vld [vmem:[%s339 + $0x10] sm:$0xff]
        %v343 = vld [vmem:[%s339 + $0x18] sm:$0xff]
        %v344 = vld [vmem:[%s339 + $0x20] sm:$0xff]
        %v345 = vld [vmem:[%s339 + $0x28] sm:$0xff]
        %v346 = vld [vmem:[%s339 + $0x30] sm:$0xff]
        %v347 = vld [vmem:[%s339 + $0x38] sm:$0xff]
        %v348 = vld [vmem:[%s260] sm:$0xff]
        %v349 = vld [vmem:[%s260 + $0x8] sm:$0xff]
        %v350 = vld [vmem:[%s260 + $0x10] sm:$0xff]
        %v351 = vld [vmem:[%s260 + $0x18] sm:$0xff]
        %v352 = vld [vmem:[%s305] sm:$0x1]
        %v354 = vlaneseq
        %v355 = vshrl.u32 %v354, 7
        %v356 = vsub.s32 0, %v355
        %v357 = vrot.slane %v352, %v356
        %vm359 = vcmask 261120
        %v361 = vsel %vm359, %v340, 0
        %v364 = vsel %vm359, %v341, 0
        %v367 = vsel %vm359, %v342, 0
        %v370 = vsel %vm359, %v343, 0
        %v373 = vsel %vm359, %v344, 0
        %v376 = vsel %vm359, %v345, 0
        %v379 = vsel %vm359, %v346, 0
        %v382 = vsel %vm359, %v347, 0
        %384 = vmatprep.subr.mxu0 0.0
        %385 = vmatpush1.msra.mxu0 0.0
        %386 = vmatprep.subr.mxu0 0.0
        %387 = vmatpush1.msra.mxu0 0.0
        %388 = vmatprep.subr.mxu0 0.0
        %389 = vmatpush1.msra.mxu0 0.0
        %390 = vmatprep.subr.mxu0 0.0
        %391 = vmatpush1.msra.mxu0 0.0
        %392 = vmatprep.subr.mxu0 0.0
        %393 = vmatpush1.msra.mxu0 0.0
        %394 = vmatprep.subr.mxu0 0.0
        %395 = vmatpush1.msra.mxu0 0.0
        %396 = vmatprep.subr.mxu0 0.0
        %397 = vmatpush1.msra.mxu0 0.0
        %398 = vmatprep.subr.mxu0 0.0
        %399 = vmatpush1.msra.mxu0 0.0
        %400 = vmatprep.subr.mxu0 0.0
        %401 = vmatpush1.msra.mxu0 0.0
        %402 = vmatprep.subr.mxu0 0.0
        %403 = vmatpush1.msra.mxu0 0.0
        %404 = vmatprep.subr.mxu0 0.0
        %405 = vmatpush1.msra.mxu0 0.0
        %406 = vmatprep.subr.mxu0 0.0
        %407 = vmatpush1.msra.mxu0 0.0
        %408 = vmatprep.subr.mxu0 0.0
        %409 = vmatpush1.msra.mxu0 %v351
        %410 = vmatprep.subr.mxu0 0.0
        %411 = vmatpush1.msra.mxu0 %v350
        %412 = vmatprep.subr.mxu0 0.0
        %413 = vmatpush1.msra.mxu0 %v349
        %414 = vmatprep.subr.mxu0 0.0
        %415 = vmatpush1.msra.mxu0 %v348
        %416 = vmatprep.subr.mxu0 0.0
        %417 = vmatpush2.msra.mxu0 0.0
        %418 = vmatprep.subr.mxu0 0.0
        %419 = vmatpush2.msra.mxu0 0.0
        %420 = vmatprep.subr.mxu0 0.0
        %421 = vmatpush2.msra.mxu0 0.0
        %422 = vmatprep.subr.mxu0 0.0
        %423 = vmatpush2.msra.mxu0 0.0
        %424 = vmatprep.subr.mxu0 0.0
        %425 = vmatpush2.msra.mxu0 0.0
        %426 = vmatprep.subr.mxu0 0.0
        %427 = vmatpush2.msra.mxu0 0.0
        %428 = vmatprep.subr.mxu0 0.0
        %429 = vmatpush2.msra.mxu0 0.0
        %430 = vmatprep.subr.mxu0 0.0
        %431 = vmatpush2.msra.mxu0 0.0
        %432 = vmatprep.subr.mxu0 0.0
        %433 = vmatpush2.msra.mxu0 0.0
        %434 = vmatprep.subr.mxu0 0.0
        %435 = vmatpush2.msra.mxu0 0.0
        %436 = vmatprep.subr.mxu0 0.0
        %437 = vmatpush2.msra.mxu0 0.0
        %438 = vmatprep.subr.mxu0 0.0
        %439 = vmatpush2.msra.mxu0 0.0
        %440 = vmatprep.subr.mxu0 0.0
        %441 = vmatpush2.msra.mxu0 0.0
        %442 = vmatprep.subr.mxu0 0.0
        %443 = vmatpush2.msra.mxu0 0.0
        %444 = vmatprep.subr.mxu0 0.0
        %445 = vmatpush2.msra.mxu0 0.0
        %446 = vmatprep.subr.mxu0 0.0
        %447 = vmatpush2.msra.mxu0 0.0
        %448 = vmatprep.mubr.f32.mxu0 0.0
        %449 = vmatmul.mubr.f32.gmra.mxu0 %v361
        %v450 = vpop.f32.mrf.mxu0
        %v451 = vadd.f32 %v357, %v450
        %v452 = vpop.f32.mrf.mxu0
        %453 = vmatprep.mubr.f32.mxu0 0.0
        %454 = vmatmul.mubr.f32.gmra.mxu0 %v364
        %v455 = vpop.f32.mrf.mxu0
        %v456 = vadd.f32 %v357, %v455
        %v457 = vpop.f32.mrf.mxu0
        %458 = vmatprep.mubr.f32.mxu0 0.0
        %459 = vmatmul.mubr.f32.gmra.mxu0 %v367
        %v460 = vpop.f32.mrf.mxu0
        %v461 = vadd.f32 %v357, %v460
        %v462 = vpop.f32.mrf.mxu0
        %463 = vmatprep.mubr.f32.mxu0 0.0
        %464 = vmatmul.mubr.f32.gmra.mxu0 %v370
        %v465 = vpop.f32.mrf.mxu0
        %v466 = vadd.f32 %v357, %v465
        %v467 = vpop.f32.mrf.mxu0
        %468 = vmatprep.mubr.f32.mxu0 0.0
        %469 = vmatmul.mubr.f32.gmra.mxu0 %v373
        %v470 = vpop.f32.mrf.mxu0
        %v471 = vadd.f32 %v357, %v470
        %v472 = vpop.f32.mrf.mxu0
        %473 = vmatprep.mubr.f32.mxu0 0.0
        %474 = vmatmul.mubr.f32.gmra.mxu0 %v376
        %v475 = vpop.f32.mrf.mxu0
        %v476 = vadd.f32 %v357, %v475
        %v477 = vpop.f32.mrf.mxu0
        %478 = vmatprep.mubr.f32.mxu0 0.0
        %479 = vmatmul.mubr.f32.gmra.mxu0 %v379
        %v480 = vpop.f32.mrf.mxu0
        %v481 = vadd.f32 %v357, %v480
        %v482 = vpop.f32.mrf.mxu0
        %483 = vmatprep.mubr.f32.mxu0 0.0
        %484 = vmatmul.mubr.f32.gmra.mxu0 %v382
        %v485 = vpop.f32.mrf.mxu0
        %v486 = vadd.f32 %v357, %v485
        %v487 = vpop.f32.mrf.mxu0
        %488 = vdwg.mxu0
        %489 = vst [vmem:[#allocation3] sm:$0xff] %v451
        %490 = vst [vmem:[#allocation3 + $0x8] sm:$0xff] %v456
        %491 = vst [vmem:[#allocation3 + $0x10] sm:$0xff] %v461
        %492 = vst [vmem:[#allocation3 + $0x18] sm:$0xff] %v466
        %493 = vst [vmem:[#allocation3 + $0x20] sm:$0xff] %v471
        %494 = vst [vmem:[#allocation3 + $0x28] sm:$0xff] %v476
        %495 = vst [vmem:[#allocation3 + $0x30] sm:$0xff] %v481
        %496 = vst [vmem:[#allocation3 + $0x38] sm:$0xff] %v486
        %v497 = vld [vmem:[%s269] sm:$0xff]
        %v498 = vld [vmem:[%s269 + $0x8] sm:$0xff]
        %v499 = vld [vmem:[%s269 + $0x10] sm:$0xff]
        %v500 = vld [vmem:[%s269 + $0x18] sm:$0xff]
        %v501 = vld [vmem:[#allocation4] sm:$0xff]
        %v502 = vld [vmem:[#allocation5] sm:$0xff]
        %v503 = vld [vmem:[#allocation3] sm:$0xff]
        %v505 = vsel %vm359, %v501, 0
        %507 = vmatprep.subr.mxu0 0.0
        %508 = vmatpush1.msra.mxu0 0.0
        %509 = vmatprep.subr.mxu0 0.0
        %510 = vmatpush1.msra.mxu0 0.0
        %511 = vmatprep.subr.mxu0 0.0
        %512 = vmatpush1.msra.mxu0 0.0
        %513 = vmatprep.subr.mxu0 0.0
        %514 = vmatpush1.msra.mxu0 0.0
        %515 = vmatprep.subr.mxu0 0.0
        %516 = vmatpush1.msra.mxu0 0.0
        %517 = vmatprep.subr.mxu0 0.0
        %518 = vmatpush1.msra.mxu0 0.0
        %519 = vmatprep.subr.mxu0 0.0
        %520 = vmatpush1.msra.mxu0 0.0
        %521 = vmatprep.subr.mxu0 0.0
        %522 = vmatpush1.msra.mxu0 0.0
        %523 = vmatprep.subr.mxu0 0.0
        %524 = vmatpush1.msra.mxu0 0.0
        %525 = vmatprep.subr.mxu0 0.0
        %526 = vmatpush1.msra.mxu0 0.0
        %527 = vmatprep.subr.mxu0 0.0
        %528 = vmatpush1.msra.mxu0 0.0
        %529 = vmatprep.subr.mxu0 0.0
        %530 = vmatpush1.msra.mxu0 0.0
        %531 = vmatprep.subr.mxu0 0.0
        %532 = vmatpush1.msra.mxu0 %v500
        %533 = vmatprep.subr.mxu0 0.0
        %534 = vmatpush1.msra.mxu0 %v499
        %535 = vmatprep.subr.mxu0 0.0
        %536 = vmatpush1.msra.mxu0 %v498
        %537 = vmatprep.subr.mxu0 0.0
        %538 = vmatpush1.msra.mxu0 %v497
        %539 = vmatprep.subr.mxu0 0.0
        %540 = vmatpush2.msra.mxu0 0.0
        %541 = vmatprep.subr.mxu0 0.0
        %542 = vmatpush2.msra.mxu0 0.0
        %543 = vmatprep.subr.mxu0 0.0
        %544 = vmatpush2.msra.mxu0 0.0
        %545 = vmatprep.subr.mxu0 0.0
        %546 = vmatpush2.msra.mxu0 0.0
        %547 = vmatprep.subr.mxu0 0.0
        %548 = vmatpush2.msra.mxu0 0.0
        %549 = vmatprep.subr.mxu0 0.0
        %550 = vmatpush2.msra.mxu0 0.0
        %551 = vmatprep.subr.mxu0 0.0
        %552 = vmatpush2.msra.mxu0 0.0
        %553 = vmatprep.subr.mxu0 0.0
        %554 = vmatpush2.msra.mxu0 0.0
        %555 = vmatprep.subr.mxu0 0.0
        %556 = vmatpush2.msra.mxu0 0.0
        %557 = vmatprep.subr.mxu0 0.0
        %558 = vmatpush2.msra.mxu0 0.0
        %559 = vmatprep.subr.mxu0 0.0
        %560 = vmatpush2.msra.mxu0 0.0
        %561 = vmatprep.subr.mxu0 0.0
        %562 = vmatpush2.msra.mxu0 0.0
        %563 = vmatprep.subr.mxu0 0.0
        %564 = vmatpush2.msra.mxu0 0.0
        %565 = vmatprep.subr.mxu0 0.0
        %566 = vmatpush2.msra.mxu0 0.0
        %567 = vmatprep.subr.mxu0 0.0
        %568 = vmatpush2.msra.mxu0 0.0
        %569 = vmatprep.subr.mxu0 0.0
        %570 = vmatpush2.msra.mxu0 0.0
        %571 = vmatprep.mubr.f32.mxu0 0.0
        %572 = vmatmul.mubr.f32.gmra.mxu0 %v505
        %v573 = vpop.f32.mrf.mxu0
        %v574 = vadd.f32 0.0, %v573
        %v575 = vpop.f32.mrf.mxu0
        %576 = vdwg.mxu0
        %v577 = vadd.f32 %v503, %v574
        %v578 = vxor.u32 %v577, 2147483648
        %v579 = vmul.f32 %v578, 1.442695
        %v580 = vpow.pop %v579
        %v581 = vadd.f32 %v580, 1.0
        %v582 = vrcp.pop %v581
        %v583 = vmul.f32 1.0, %v582
        %v584 = vtanh.pop %v577
        %586 = vrot.lane.b32.xlu0 %v502, 32
        %v587 = vpop.permute.xlu0 %586
        %v589 = vmul.f32 %v583, %v587
        %591 = vrot.lane.b32.xlu0 %v584, 32
        %v592 = vpop.permute.xlu0 %591
        %v594 = vmul.f32 %v583, %v592
        %596 = vrot.lane.b32.xlu0 %v594, 32
        %v597 = vpop.permute.xlu0 %596
        %v599 = vadd.f32 %v589, %v597
        %v600 = vtanh.pop %v599
        %602 = vrot.lane.b32.xlu0 %v600, 32
        %v603 = vpop.permute.xlu0 %602
        %v605 = vmul.f32 %v583, %v603
        %607 = vrot.lane.b32.xlu0 %v605, 64
        %v608 = vpop.permute.xlu0 %607
        %610 = vst.msk [vmem:[%s339] sm:$0xff] %vm359, %v608
        %s611 = scalar_lea.vmem [#allocation3], 8
        %v612 = vld [vmem:[%s611] sm:$0xff]
        %v613 = vsel %vm359, %v608, 0
        %615 = vmatprep.subr.mxu0 0.0
        %616 = vmatpush1.msra.mxu0 0.0
        %617 = vmatprep.subr.mxu0 0.0
        %618 = vmatpush1.msra.mxu0 0.0
        %619 = vmatprep.subr.mxu0 0.0
        %620 = vmatpush1.msra.mxu0 0.0
        %621 = vmatprep.subr.mxu0 0.0
        %622 = vmatpush1.msra.mxu0 0.0
        %623 = vmatprep.subr.mxu0 0.0
        %624 = vmatpush1.msra.mxu0 0.0
        %625 = vmatprep.subr.mxu0 0.0
        %626 = vmatpush1.msra.mxu0 0.0
        %627 = vmatprep.subr.mxu0 0.0
        %628 = vmatpush1.msra.mxu0 0.0
        %629 = vmatprep.subr.mxu0 0.0
        %630 = vmatpush1.msra.mxu0 0.0
        %631 = vmatprep.subr.mxu0 0.0
        %632 = vmatpush1.msra.mxu0 0.0
        %633 = vmatprep.subr.mxu0 0.0
        %634 = vmatpush1.msra.mxu0 0.0
        %635 = vmatprep.subr.mxu0 0.0
        %636 = vmatpush1.msra.mxu0 0.0
        %637 = vmatprep.subr.mxu0 0.0
        %638 = vmatpush1.msra.mxu0 0.0
        %639 = vmatprep.subr.mxu0 0.0
        %640 = vmatpush1.msra.mxu0 %v500
        %641 = vmatprep.subr.mxu0 0.0
        %642 = vmatpush1.msra.mxu0 %v499
        %643 = vmatprep.subr.mxu0 0.0
        %644 = vmatpush1.msra.mxu0 %v498
        %645 = vmatprep.subr.mxu0 0.0
        %646 = vmatpush1.msra.mxu0 %v497
        %647 = vmatprep.subr.mxu0 0.0
        %648 = vmatpush2.msra.mxu0 0.0
        %649 = vmatprep.subr.mxu0 0.0
        %650 = vmatpush2.msra.mxu0 0.0
        %651 = vmatprep.subr.mxu0 0.0
        %652 = vmatpush2.msra.mxu0 0.0
        %653 = vmatprep.subr.mxu0 0.0
        %654 = vmatpush2.msra.mxu0 0.0
        %655 = vmatprep.subr.mxu0 0.0
        %656 = vmatpush2.msra.mxu0 0.0
        %657 = vmatprep.subr.mxu0 0.0
        %658 = vmatpush2.msra.mxu0 0.0
        %659 = vmatprep.subr.mxu0 0.0
        %660 = vmatpush2.msra.mxu0 0.0
        %661 = vmatprep.subr.mxu0 0.0
        %662 = vmatpush2.msra.mxu0 0.0
        %663 = vmatprep.subr.mxu0 0.0
        %664 = vmatpush2.msra.mxu0 0.0
        %665 = vmatprep.subr.mxu0 0.0
        %666 = vmatpush2.msra.mxu0 0.0
        %667 = vmatprep.subr.mxu0 0.0
        %668 = vmatpush2.msra.mxu0 0.0
        %669 = vmatprep.subr.mxu0 0.0
        %670 = vmatpush2.msra.mxu0 0.0
        %671 = vmatprep.subr.mxu0 0.0
        %672 = vmatpush2.msra.mxu0 0.0
        %673 = vmatprep.subr.mxu0 0.0
        %674 = vmatpush2.msra.mxu0 0.0
        %675 = vmatprep.subr.mxu0 0.0
        %676 = vmatpush2.msra.mxu0 0.0
        %677 = vmatprep.subr.mxu0 0.0
        %678 = vmatpush2.msra.mxu0 0.0
        %679 = vmatprep.mubr.f32.mxu0 0.0
        %680 = vmatmul.mubr.f32.gmra.mxu0 %v613
        %v681 = vpop.f32.mrf.mxu0
        %v682 = vadd.f32 0.0, %v681
        %v683 = vpop.f32.mrf.mxu0
        %684 = vdwg.mxu0
        %v685 = vadd.f32 %v612, %v682
        %v686 = vxor.u32 %v685, 2147483648
        %v687 = vmul.f32 %v686, 1.442695
        %v688 = vpow.pop %v687
        %v689 = vadd.f32 %v688, 1.0
        %v690 = vrcp.pop %v689
        %v691 = vmul.f32 1.0, %v690
        %v692 = vtanh.pop %v685
        %v693 = vmul.f32 %v691, %v599
        %695 = vrot.lane.b32.xlu0 %v692, 32
        %v696 = vpop.permute.xlu0 %695
        %v698 = vmul.f32 %v691, %v696
        %700 = vrot.lane.b32.xlu0 %v698, 32
        %v701 = vpop.permute.xlu0 %700
        %v703 = vadd.f32 %v693, %v701
        %v704 = vtanh.pop %v703
        %706 = vrot.lane.b32.xlu0 %v704, 32
        %v707 = vpop.permute.xlu0 %706
        %v709 = vmul.f32 %v691, %v707
        %s710 = sadd.s32 %s310, 1
        %712 = vrot.lane.b32.xlu0 %v709, 64
        %v713 = vpop.permute.xlu0 %712
        %s715 = smul.u32 %s710, 8
        %s716 = scalar_lea.vmem [#allocation2], %s715
        %717 = vst.msk [vmem:[%s716] sm:$0xff] %vm359, %v713
        %s718 = scalar_lea.vmem [#allocation3], 16
        %v719 = vld [vmem:[%s718] sm:$0xff]
        %v720 = vsel %vm359, %v713, 0
        %722 = vmatprep.subr.mxu0 0.0
        %723 = vmatpush1.msra.mxu0 0.0
        %724 = vmatprep.subr.mxu0 0.0
        %725 = vmatpush1.msra.mxu0 0.0
        %726 = vmatprep.subr.mxu0 0.0
        %727 = vmatpush1.msra.mxu0 0.0
        %728 = vmatprep.subr.mxu0 0.0
        %729 = vmatpush1.msra.mxu0 0.0
        %730 = vmatprep.subr.mxu0 0.0
        %731 = vmatpush1.msra.mxu0 0.0
        %732 = vmatprep.subr.mxu0 0.0
        %733 = vmatpush1.msra.mxu0 0.0
        %734 = vmatprep.subr.mxu0 0.0
        %735 = vmatpush1.msra.mxu0 0.0
        %736 = vmatprep.subr.mxu0 0.0
        %737 = vmatpush1.msra.mxu0 0.0
        %738 = vmatprep.subr.mxu0 0.0
        %739 = vmatpush1.msra.mxu0 0.0
        %740 = vmatprep.subr.mxu0 0.0
        %741 = vmatpush1.msra.mxu0 0.0
        %742 = vmatprep.subr.mxu0 0.0
        %743 = vmatpush1.msra.mxu0 0.0
        %744 = vmatprep.subr.mxu0 0.0
        %745 = vmatpush1.msra.mxu0 0.0
        %746 = vmatprep.subr.mxu0 0.0
        %747 = vmatpush1.msra.mxu0 %v500
        %748 = vmatprep.subr.mxu0 0.0
        %749 = vmatpush1.msra.mxu0 %v499
        %750 = vmatprep.subr.mxu0 0.0
        %751 = vmatpush1.msra.mxu0 %v498
        %752 = vmatprep.subr.mxu0 0.0
        %753 = vmatpush1.msra.mxu0 %v497
        %754 = vmatprep.subr.mxu0 0.0
        %755 = vmatpush2.msra.mxu0 0.0
        %756 = vmatprep.subr.mxu0 0.0
        %757 = vmatpush2.msra.mxu0 0.0
        %758 = vmatprep.subr.mxu0 0.0
        %759 = vmatpush2.msra.mxu0 0.0
        %760 = vmatprep.subr.mxu0 0.0
        %761 = vmatpush2.msra.mxu0 0.0
        %762 = vmatprep.subr.mxu0 0.0
        %763 = vmatpush2.msra.mxu0 0.0
        %764 = vmatprep.subr.mxu0 0.0
        %765 = vmatpush2.msra.mxu0 0.0
        %766 = vmatprep.subr.mxu0 0.0
        %767 = vmatpush2.msra.mxu0 0.0
        %768 = vmatprep.subr.mxu0 0.0
        %769 = vmatpush2.msra.mxu0 0.0
        %770 = vmatprep.subr.mxu0 0.0
        %771 = vmatpush2.msra.mxu0 0.0
        %772 = vmatprep.subr.mxu0 0.0
        %773 = vmatpush2.msra.mxu0 0.0
        %774 = vmatprep.subr.mxu0 0.0
        %775 = vmatpush2.msra.mxu0 0.0
        %776 = vmatprep.subr.mxu0 0.0
        %777 = vmatpush2.msra.mxu0 0.0
        %778 = vmatprep.subr.mxu0 0.0
        %779 = vmatpush2.msra.mxu0 0.0
        %780 = vmatprep.subr.mxu0 0.0
        %781 = vmatpush2.msra.mxu0 0.0
        %782 = vmatprep.subr.mxu0 0.0
        %783 = vmatpush2.msra.mxu0 0.0
        %784 = vmatprep.subr.mxu0 0.0
        %785 = vmatpush2.msra.mxu0 0.0
        %786 = vmatprep.mubr.f32.mxu0 0.0
        %787 = vmatmul.mubr.f32.gmra.mxu0 %v720
        %v788 = vpop.f32.mrf.mxu0
        %v789 = vadd.f32 0.0, %v788
        %v790 = vpop.f32.mrf.mxu0
        %791 = vdwg.mxu0
        %v792 = vadd.f32 %v719, %v789
        %v793 = vxor.u32 %v792, 2147483648
        %v794 = vmul.f32 %v793, 1.442695
        %v795 = vpow.pop %v794
        %v796 = vadd.f32 %v795, 1.0
        %v797 = vrcp.pop %v796
        %v798 = vmul.f32 1.0, %v797
        %v799 = vtanh.pop %v792
        %v800 = vmul.f32 %v798, %v703
        %802 = vrot.lane.b32.xlu0 %v799, 32
        %v803 = vpop.permute.xlu0 %802
        %v805 = vmul.f32 %v798, %v803
        %807 = vrot.lane.b32.xlu0 %v805, 32
        %v808 = vpop.permute.xlu0 %807
        %v810 = vadd.f32 %v800, %v808
        %v811 = vtanh.pop %v810
        %813 = vrot.lane.b32.xlu0 %v811, 32
        %v814 = vpop.permute.xlu0 %813
        %v816 = vmul.f32 %v798, %v814
        %s817 = sadd.s32 %s310, 2
        %819 = vrot.lane.b32.xlu0 %v816, 64
        %v820 = vpop.permute.xlu0 %819
        %s822 = smul.u32 %s817, 8
        %s823 = scalar_lea.vmem [#allocation2], %s822
        %824 = vst.msk [vmem:[%s823] sm:$0xff] %vm359, %v820
        %s825 = scalar_lea.vmem [#allocation3], 24
        %v826 = vld [vmem:[%s825] sm:$0xff]
        %v827 = vsel %vm359, %v820, 0
        %829 = vmatprep.subr.mxu0 0.0
        %830 = vmatpush1.msra.mxu0 0.0
        %831 = vmatprep.subr.mxu0 0.0
        %832 = vmatpush1.msra.mxu0 0.0
        %833 = vmatprep.subr.mxu0 0.0
        %834 = vmatpush1.msra.mxu0 0.0
        %835 = vmatprep.subr.mxu0 0.0
        %836 = vmatpush1.msra.mxu0 0.0
        %837 = vmatprep.subr.mxu0 0.0
        %838 = vmatpush1.msra.mxu0 0.0
        %839 = vmatprep.subr.mxu0 0.0
        %840 = vmatpush1.msra.mxu0 0.0
        %841 = vmatprep.subr.mxu0 0.0
        %842 = vmatpush1.msra.mxu0 0.0
        %843 = vmatprep.subr.mxu0 0.0
        %844 = vmatpush1.msra.mxu0 0.0
        %845 = vmatprep.subr.mxu0 0.0
        %846 = vmatpush1.msra.mxu0 0.0
        %847 = vmatprep.subr.mxu0 0.0
        %848 = vmatpush1.msra.mxu0 0.0
        %849 = vmatprep.subr.mxu0 0.0
        %850 = vmatpush1.msra.mxu0 0.0
        %851 = vmatprep.subr.mxu0 0.0
        %852 = vmatpush1.msra.mxu0 0.0
        %853 = vmatprep.subr.mxu0 0.0
        %854 = vmatpush1.msra.mxu0 %v500
        %855 = vmatprep.subr.mxu0 0.0
        %856 = vmatpush1.msra.mxu0 %v499
        %857 = vmatprep.subr.mxu0 0.0
        %858 = vmatpush1.msra.mxu0 %v498
        %859 = vmatprep.subr.mxu0 0.0
        %860 = vmatpush1.msra.mxu0 %v497
        %861 = vmatprep.subr.mxu0 0.0
        %862 = vmatpush2.msra.mxu0 0.0
        %863 = vmatprep.subr.mxu0 0.0
        %864 = vmatpush2.msra.mxu0 0.0
        %865 = vmatprep.subr.mxu0 0.0
        %866 = vmatpush2.msra.mxu0 0.0
        %867 = vmatprep.subr.mxu0 0.0
        %868 = vmatpush2.msra.mxu0 0.0
        %869 = vmatprep.subr.mxu0 0.0
        %870 = vmatpush2.msra.mxu0 0.0
        %871 = vmatprep.subr.mxu0 0.0
        %872 = vmatpush2.msra.mxu0 0.0
        %873 = vmatprep.subr.mxu0 0.0
        %874 = vmatpush2.msra.mxu0 0.0
        %875 = vmatprep.subr.mxu0 0.0
        %876 = vmatpush2.msra.mxu0 0.0
        %877 = vmatprep.subr.mxu0 0.0
        %878 = vmatpush2.msra.mxu0 0.0
        %879 = vmatprep.subr.mxu0 0.0
        %880 = vmatpush2.msra.mxu0 0.0
        %881 = vmatprep.subr.mxu0 0.0
        %882 = vmatpush2.msra.mxu0 0.0
        %883 = vmatprep.subr.mxu0 0.0
        %884 = vmatpush2.msra.mxu0 0.0
        %885 = vmatprep.subr.mxu0 0.0
        %886 = vmatpush2.msra.mxu0 0.0
        %887 = vmatprep.subr.mxu0 0.0
        %888 = vmatpush2.msra.mxu0 0.0
        %889 = vmatprep.subr.mxu0 0.0
        %890 = vmatpush2.msra.mxu0 0.0
        %891 = vmatprep.subr.mxu0 0.0
        %892 = vmatpush2.msra.mxu0 0.0
        %893 = vmatprep.mubr.f32.mxu0 0.0
        %894 = vmatmul.mubr.f32.gmra.mxu0 %v827
        %v895 = vpop.f32.mrf.mxu0
        %v896 = vadd.f32 0.0, %v895
        %v897 = vpop.f32.mrf.mxu0
        %898 = vdwg.mxu0
        %v899 = vadd.f32 %v826, %v896
        %v900 = vxor.u32 %v899, 2147483648
        %v901 = vmul.f32 %v900, 1.442695
        %v902 = vpow.pop %v901
        %v903 = vadd.f32 %v902, 1.0
        %v904 = vrcp.pop %v903
        %v905 = vmul.f32 1.0, %v904
        %v906 = vtanh.pop %v899
        %v907 = vmul.f32 %v905, %v810
        %909 = vrot.lane.b32.xlu0 %v906, 32
        %v910 = vpop.permute.xlu0 %909
        %v912 = vmul.f32 %v905, %v910
        %914 = vrot.lane.b32.xlu0 %v912, 32
        %v915 = vpop.permute.xlu0 %914
        %v917 = vadd.f32 %v907, %v915
        %v918 = vtanh.pop %v917
        %920 = vrot.lane.b32.xlu0 %v918, 32
        %v921 = vpop.permute.xlu0 %920
        %v923 = vmul.f32 %v905, %v921
        %s924 = sadd.s32 %s310, 3
        %926 = vrot.lane.b32.xlu0 %v923, 64
        %v927 = vpop.permute.xlu0 %926
        %s929 = smul.u32 %s924, 8
        %s930 = scalar_lea.vmem [#allocation2], %s929
        %931 = vst.msk [vmem:[%s930] sm:$0xff] %vm359, %v927
        %s932 = scalar_lea.vmem [#allocation3], 32
        %v933 = vld [vmem:[%s932] sm:$0xff]
        %v934 = vsel %vm359, %v927, 0
        %936 = vmatprep.subr.mxu0 0.0
        %937 = vmatpush1.msra.mxu0 0.0
        %938 = vmatprep.subr.mxu0 0.0
        %939 = vmatpush1.msra.mxu0 0.0
        %940 = vmatprep.subr.mxu0 0.0
        %941 = vmatpush1.msra.mxu0 0.0
        %942 = vmatprep.subr.mxu0 0.0
        %943 = vmatpush1.msra.mxu0 0.0
        %944 = vmatprep.subr.mxu0 0.0
        %945 = vmatpush1.msra.mxu0 0.0
        %946 = vmatprep.subr.mxu0 0.0
        %947 = vmatpush1.msra.mxu0 0.0
        %948 = vmatprep.subr.mxu0 0.0
        %949 = vmatpush1.msra.mxu0 0.0
        %950 = vmatprep.subr.mxu0 0.0
        %951 = vmatpush1.msra.mxu0 0.0
        %952 = vmatprep.subr.mxu0 0.0
        %953 = vmatpush1.msra.mxu0 0.0
        %954 = vmatprep.subr.mxu0 0.0
        %955 = vmatpush1.msra.mxu0 0.0
        %956 = vmatprep.subr.mxu0 0.0
        %957 = vmatpush1.msra.mxu0 0.0
        %958 = vmatprep.subr.mxu0 0.0
        %959 = vmatpush1.msra.mxu0 0.0
        %960 = vmatprep.subr.mxu0 0.0
        %961 = vmatpush1.msra.mxu0 %v500
        %962 = vmatprep.subr.mxu0 0.0
        %963 = vmatpush1.msra.mxu0 %v499
        %964 = vmatprep.subr.mxu0 0.0
        %965 = vmatpush1.msra.mxu0 %v498
        %966 = vmatprep.subr.mxu0 0.0
        %967 = vmatpush1.msra.mxu0 %v497
        %968 = vmatprep.subr.mxu0 0.0
        %969 = vmatpush2.msra.mxu0 0.0
        %970 = vmatprep.subr.mxu0 0.0
        %971 = vmatpush2.msra.mxu0 0.0
        %972 = vmatprep.subr.mxu0 0.0
        %973 = vmatpush2.msra.mxu0 0.0
        %974 = vmatprep.subr.mxu0 0.0
        %975 = vmatpush2.msra.mxu0 0.0
        %976 = vmatprep.subr.mxu0 0.0
        %977 = vmatpush2.msra.mxu0 0.0
        %978 = vmatprep.subr.mxu0 0.0
        %979 = vmatpush2.msra.mxu0 0.0
        %980 = vmatprep.subr.mxu0 0.0
        %981 = vmatpush2.msra.mxu0 0.0
        %982 = vmatprep.subr.mxu0 0.0
        %983 = vmatpush2.msra.mxu0 0.0
        %984 = vmatprep.subr.mxu0 0.0
        %985 = vmatpush2.msra.mxu0 0.0
        %986 = vmatprep.subr.mxu0 0.0
        %987 = vmatpush2.msra.mxu0 0.0
        %988 = vmatprep.subr.mxu0 0.0
        %989 = vmatpush2.msra.mxu0 0.0
        %990 = vmatprep.subr.mxu0 0.0
        %991 = vmatpush2.msra.mxu0 0.0
        %992 = vmatprep.subr.mxu0 0.0
        %993 = vmatpush2.msra.mxu0 0.0
        %994 = vmatprep.subr.mxu0 0.0
        %995 = vmatpush2.msra.mxu0 0.0
        %996 = vmatprep.subr.mxu0 0.0
        %997 = vmatpush2.msra.mxu0 0.0
        %998 = vmatprep.subr.mxu0 0.0
        %999 = vmatpush2.msra.mxu0 0.0
        %1000 = vmatprep.mubr.f32.mxu0 0.0
        %1001 = vmatmul.mubr.f32.gmra.mxu0 %v934
        %v1002 = vpop.f32.mrf.mxu0
        %v1003 = vadd.f32 0.0, %v1002
        %v1004 = vpop.f32.mrf.mxu0
        %1005 = vdwg.mxu0
        %v1006 = vadd.f32 %v933, %v1003
        %v1007 = vxor.u32 %v1006, 2147483648
        %v1008 = vmul.f32 %v1007, 1.442695
        %v1009 = vpow.pop %v1008
        %v1010 = vadd.f32 %v1009, 1.0
        %v1011 = vrcp.pop %v1010
        %v1012 = vmul.f32 1.0, %v1011
        %v1013 = vtanh.pop %v1006
        %v1014 = vmul.f32 %v1012, %v917
        %1016 = vrot.lane.b32.xlu0 %v1013, 32
        %v1017 = vpop.permute.xlu0 %1016
        %v1019 = vmul.f32 %v1012, %v1017
        %1021 = vrot.lane.b32.xlu0 %v1019, 32
        %v1022 = vpop.permute.xlu0 %1021
        %v1024 = vadd.f32 %v1014, %v1022
        %v1025 = vtanh.pop %v1024
        %1027 = vrot.lane.b32.xlu0 %v1025, 32
        %v1028 = vpop.permute.xlu0 %1027
        %v1030 = vmul.f32 %v1012, %v1028
        %s1031 = sadd.s32 %s310, 4
        %1033 = vrot.lane.b32.xlu0 %v1030, 64
        %v1034 = vpop.permute.xlu0 %1033
        %s1036 = smul.u32 %s1031, 8
        %s1037 = scalar_lea.vmem [#allocation2], %s1036
        %1038 = vst.msk [vmem:[%s1037] sm:$0xff] %vm359, %v1034
        %s1039 = scalar_lea.vmem [#allocation3], 40
        %v1040 = vld [vmem:[%s1039] sm:$0xff]
        %v1041 = vsel %vm359, %v1034, 0
        %1043 = vmatprep.subr.mxu0 0.0
        %1044 = vmatpush1.msra.mxu0 0.0
        %1045 = vmatprep.subr.mxu0 0.0
        %1046 = vmatpush1.msra.mxu0 0.0
        %1047 = vmatprep.subr.mxu0 0.0
        %1048 = vmatpush1.msra.mxu0 0.0
        %1049 = vmatprep.subr.mxu0 0.0
        %1050 = vmatpush1.msra.mxu0 0.0
        %1051 = vmatprep.subr.mxu0 0.0
        %1052 = vmatpush1.msra.mxu0 0.0
        %1053 = vmatprep.subr.mxu0 0.0
        %1054 = vmatpush1.msra.mxu0 0.0
        %1055 = vmatprep.subr.mxu0 0.0
        %1056 = vmatpush1.msra.mxu0 0.0
        %1057 = vmatprep.subr.mxu0 0.0
        %1058 = vmatpush1.msra.mxu0 0.0
        %1059 = vmatprep.subr.mxu0 0.0
        %1060 = vmatpush1.msra.mxu0 0.0
        %1061 = vmatprep.subr.mxu0 0.0
        %1062 = vmatpush1.msra.mxu0 0.0
        %1063 = vmatprep.subr.mxu0 0.0
        %1064 = vmatpush1.msra.mxu0 0.0
        %1065 = vmatprep.subr.mxu0 0.0
        %1066 = vmatpush1.msra.mxu0 0.0
        %1067 = vmatprep.subr.mxu0 0.0
        %1068 = vmatpush1.msra.mxu0 %v500
        %1069 = vmatprep.subr.mxu0 0.0
        %1070 = vmatpush1.msra.mxu0 %v499
        %1071 = vmatprep.subr.mxu0 0.0
        %1072 = vmatpush1.msra.mxu0 %v498
        %1073 = vmatprep.subr.mxu0 0.0
        %1074 = vmatpush1.msra.mxu0 %v497
        %1075 = vmatprep.subr.mxu0 0.0
        %1076 = vmatpush2.msra.mxu0 0.0
        %1077 = vmatprep.subr.mxu0 0.0
        %1078 = vmatpush2.msra.mxu0 0.0
        %1079 = vmatprep.subr.mxu0 0.0
        %1080 = vmatpush2.msra.mxu0 0.0
        %1081 = vmatprep.subr.mxu0 0.0
        %1082 = vmatpush2.msra.mxu0 0.0
        %1083 = vmatprep.subr.mxu0 0.0
        %1084 = vmatpush2.msra.mxu0 0.0
        %1085 = vmatprep.subr.mxu0 0.0
        %1086 = vmatpush2.msra.mxu0 0.0
        %1087 = vmatprep.subr.mxu0 0.0
        %1088 = vmatpush2.msra.mxu0 0.0
        %1089 = vmatprep.subr.mxu0 0.0
        %1090 = vmatpush2.msra.mxu0 0.0
        %1091 = vmatprep.subr.mxu0 0.0
        %1092 = vmatpush2.msra.mxu0 0.0
        %1093 = vmatprep.subr.mxu0 0.0
        %1094 = vmatpush2.msra.mxu0 0.0
        %1095 = vmatprep.subr.mxu0 0.0
        %1096 = vmatpush2.msra.mxu0 0.0
        %1097 = vmatprep.subr.mxu0 0.0
        %1098 = vmatpush2.msra.mxu0 0.0
        %1099 = vmatprep.subr.mxu0 0.0
        %1100 = vmatpush2.msra.mxu0 0.0
        %1101 = vmatprep.subr.mxu0 0.0
        %1102 = vmatpush2.msra.mxu0 0.0
        %1103 = vmatprep.subr.mxu0 0.0
        %1104 = vmatpush2.msra.mxu0 0.0
        %1105 = vmatprep.subr.mxu0 0.0
        %1106 = vmatpush2.msra.mxu0 0.0
        %1107 = vmatprep.mubr.f32.mxu0 0.0
        %1108 = vmatmul.mubr.f32.gmra.mxu0 %v1041
        %v1109 = vpop.f32.mrf.mxu0
        %v1110 = vadd.f32 0.0, %v1109
        %v1111 = vpop.f32.mrf.mxu0
        %1112 = vdwg.mxu0
        %v1113 = vadd.f32 %v1040, %v1110
        %v1114 = vxor.u32 %v1113, 2147483648
        %v1115 = vmul.f32 %v1114, 1.442695
        %v1116 = vpow.pop %v1115
        %v1117 = vadd.f32 %v1116, 1.0
        %v1118 = vrcp.pop %v1117
        %v1119 = vmul.f32 1.0, %v1118
        %v1120 = vtanh.pop %v1113
        %v1121 = vmul.f32 %v1119, %v1024
        %1123 = vrot.lane.b32.xlu0 %v1120, 32
        %v1124 = vpop.permute.xlu0 %1123
        %v1126 = vmul.f32 %v1119, %v1124
        %1128 = vrot.lane.b32.xlu0 %v1126, 32
        %v1129 = vpop.permute.xlu0 %1128
        %v1131 = vadd.f32 %v1121, %v1129
        %v1132 = vtanh.pop %v1131
        %1134 = vrot.lane.b32.xlu0 %v1132, 32
        %v1135 = vpop.permute.xlu0 %1134
        %v1137 = vmul.f32 %v1119, %v1135
        %s1138 = sadd.s32 %s310, 5
        %1140 = vrot.lane.b32.xlu0 %v1137, 64
        %v1141 = vpop.permute.xlu0 %1140
        %s1143 = smul.u32 %s1138, 8
        %s1144 = scalar_lea.vmem [#allocation2], %s1143
        %1145 = vst.msk [vmem:[%s1144] sm:$0xff] %vm359, %v1141
        %s1146 = scalar_lea.vmem [#allocation3], 48
        %v1147 = vld [vmem:[%s1146] sm:$0xff]
        %v1148 = vsel %vm359, %v1141, 0
        %1150 = vmatprep.subr.mxu0 0.0
        %1151 = vmatpush1.msra.mxu0 0.0
        %1152 = vmatprep.subr.mxu0 0.0
        %1153 = vmatpush1.msra.mxu0 0.0
        %1154 = vmatprep.subr.mxu0 0.0
        %1155 = vmatpush1.msra.mxu0 0.0
        %1156 = vmatprep.subr.mxu0 0.0
        %1157 = vmatpush1.msra.mxu0 0.0
        %1158 = vmatprep.subr.mxu0 0.0
        %1159 = vmatpush1.msra.mxu0 0.0
        %1160 = vmatprep.subr.mxu0 0.0
        %1161 = vmatpush1.msra.mxu0 0.0
        %1162 = vmatprep.subr.mxu0 0.0
        %1163 = vmatpush1.msra.mxu0 0.0
        %1164 = vmatprep.subr.mxu0 0.0
        %1165 = vmatpush1.msra.mxu0 0.0
        %1166 = vmatprep.subr.mxu0 0.0
        %1167 = vmatpush1.msra.mxu0 0.0
        %1168 = vmatprep.subr.mxu0 0.0
        %1169 = vmatpush1.msra.mxu0 0.0
        %1170 = vmatprep.subr.mxu0 0.0
        %1171 = vmatpush1.msra.mxu0 0.0
        %1172 = vmatprep.subr.mxu0 0.0
        %1173 = vmatpush1.msra.mxu0 0.0
        %1174 = vmatprep.subr.mxu0 0.0
        %1175 = vmatpush1.msra.mxu0 %v500
        %1176 = vmatprep.subr.mxu0 0.0
        %1177 = vmatpush1.msra.mxu0 %v499
        %1178 = vmatprep.subr.mxu0 0.0
        %1179 = vmatpush1.msra.mxu0 %v498
        %1180 = vmatprep.subr.mxu0 0.0
        %1181 = vmatpush1.msra.mxu0 %v497
        %1182 = vmatprep.subr.mxu0 0.0
        %1183 = vmatpush2.msra.mxu0 0.0
        %1184 = vmatprep.subr.mxu0 0.0
        %1185 = vmatpush2.msra.mxu0 0.0
        %1186 = vmatprep.subr.mxu0 0.0
        %1187 = vmatpush2.msra.mxu0 0.0
        %1188 = vmatprep.subr.mxu0 0.0
        %1189 = vmatpush2.msra.mxu0 0.0
        %1190 = vmatprep.subr.mxu0 0.0
        %1191 = vmatpush2.msra.mxu0 0.0
        %1192 = vmatprep.subr.mxu0 0.0
        %1193 = vmatpush2.msra.mxu0 0.0
        %1194 = vmatprep.subr.mxu0 0.0
        %1195 = vmatpush2.msra.mxu0 0.0
        %1196 = vmatprep.subr.mxu0 0.0
        %1197 = vmatpush2.msra.mxu0 0.0
        %1198 = vmatprep.subr.mxu0 0.0
        %1199 = vmatpush2.msra.mxu0 0.0
        %1200 = vmatprep.subr.mxu0 0.0
        %1201 = vmatpush2.msra.mxu0 0.0
        %1202 = vmatprep.subr.mxu0 0.0
        %1203 = vmatpush2.msra.mxu0 0.0
        %1204 = vmatprep.subr.mxu0 0.0
        %1205 = vmatpush2.msra.mxu0 0.0
        %1206 = vmatprep.subr.mxu0 0.0
        %1207 = vmatpush2.msra.mxu0 0.0
        %1208 = vmatprep.subr.mxu0 0.0
        %1209 = vmatpush2.msra.mxu0 0.0
        %1210 = vmatprep.subr.mxu0 0.0
        %1211 = vmatpush2.msra.mxu0 0.0
        %1212 = vmatprep.subr.mxu0 0.0
        %1213 = vmatpush2.msra.mxu0 0.0
        %1214 = vmatprep.mubr.f32.mxu0 0.0
        %1215 = vmatmul.mubr.f32.gmra.mxu0 %v1148
        %v1216 = vpop.f32.mrf.mxu0
        %v1217 = vadd.f32 0.0, %v1216
        %v1218 = vpop.f32.mrf.mxu0
        %1219 = vdwg.mxu0
        %v1220 = vadd.f32 %v1147, %v1217
        %v1221 = vxor.u32 %v1220, 2147483648
        %v1222 = vmul.f32 %v1221, 1.442695
        %v1223 = vpow.pop %v1222
        %v1224 = vadd.f32 %v1223, 1.0
        %v1225 = vrcp.pop %v1224
        %v1226 = vmul.f32 1.0, %v1225
        %v1227 = vtanh.pop %v1220
        %v1228 = vmul.f32 %v1226, %v1131
        %1230 = vrot.lane.b32.xlu0 %v1227, 32
        %v1231 = vpop.permute.xlu0 %1230
        %v1233 = vmul.f32 %v1226, %v1231
        %1235 = vrot.lane.b32.xlu0 %v1233, 32
        %v1236 = vpop.permute.xlu0 %1235
        %v1238 = vadd.f32 %v1228, %v1236
        %v1239 = vtanh.pop %v1238
        %1241 = vrot.lane.b32.xlu0 %v1239, 32
        %v1242 = vpop.permute.xlu0 %1241
        %v1244 = vmul.f32 %v1226, %v1242
        %s1245 = sadd.s32 %s310, 6
        %1247 = vrot.lane.b32.xlu0 %v1244, 64
        %v1248 = vpop.permute.xlu0 %1247
        %s1250 = smul.u32 %s1245, 8
        %s1251 = scalar_lea.vmem [#allocation2], %s1250
        %1252 = vst.msk [vmem:[%s1251] sm:$0xff] %vm359, %v1248
        %s1253 = scalar_lea.vmem [#allocation3], 56
        %v1254 = vld [vmem:[%s1253] sm:$0xff]
        %v1255 = vsel %vm359, %v1248, 0
        %1257 = vmatprep.subr.mxu0 0.0
        %1258 = vmatpush1.msra.mxu0 0.0
        %1259 = vmatprep.subr.mxu0 0.0
        %1260 = vmatpush1.msra.mxu0 0.0
        %1261 = vmatprep.subr.mxu0 0.0
        %1262 = vmatpush1.msra.mxu0 0.0
        %1263 = vmatprep.subr.mxu0 0.0
        %1264 = vmatpush1.msra.mxu0 0.0
        %1265 = vmatprep.subr.mxu0 0.0
        %1266 = vmatpush1.msra.mxu0 0.0
        %1267 = vmatprep.subr.mxu0 0.0
        %1268 = vmatpush1.msra.mxu0 0.0
        %1269 = vmatprep.subr.mxu0 0.0
        %1270 = vmatpush1.msra.mxu0 0.0
        %1271 = vmatprep.subr.mxu0 0.0
        %1272 = vmatpush1.msra.mxu0 0.0
        %1273 = vmatprep.subr.mxu0 0.0
        %1274 = vmatpush1.msra.mxu0 0.0
        %1275 = vmatprep.subr.mxu0 0.0
        %1276 = vmatpush1.msra.mxu0 0.0
        %1277 = vmatprep.subr.mxu0 0.0
        %1278 = vmatpush1.msra.mxu0 0.0
        %1279 = vmatprep.subr.mxu0 0.0
        %1280 = vmatpush1.msra.mxu0 0.0
        %1281 = vmatprep.subr.mxu0 0.0
        %1282 = vmatpush1.msra.mxu0 %v500
        %1283 = vmatprep.subr.mxu0 0.0
        %1284 = vmatpush1.msra.mxu0 %v499
        %1285 = vmatprep.subr.mxu0 0.0
        %1286 = vmatpush1.msra.mxu0 %v498
        %1287 = vmatprep.subr.mxu0 0.0
        %1288 = vmatpush1.msra.mxu0 %v497
        %1289 = vmatprep.subr.mxu0 0.0
        %1290 = vmatpush2.msra.mxu0 0.0
        %1291 = vmatprep.subr.mxu0 0.0
        %1292 = vmatpush2.msra.mxu0 0.0
        %1293 = vmatprep.subr.mxu0 0.0
        %1294 = vmatpush2.msra.mxu0 0.0
        %1295 = vmatprep.subr.mxu0 0.0
        %1296 = vmatpush2.msra.mxu0 0.0
        %1297 = vmatprep.subr.mxu0 0.0
        %1298 = vmatpush2.msra.mxu0 0.0
        %1299 = vmatprep.subr.mxu0 0.0
        %1300 = vmatpush2.msra.mxu0 0.0
        %1301 = vmatprep.subr.mxu0 0.0
        %1302 = vmatpush2.msra.mxu0 0.0
        %1303 = vmatprep.subr.mxu0 0.0
        %1304 = vmatpush2.msra.mxu0 0.0
        %1305 = vmatprep.subr.mxu0 0.0
        %1306 = vmatpush2.msra.mxu0 0.0
        %1307 = vmatprep.subr.mxu0 0.0
        %1308 = vmatpush2.msra.mxu0 0.0
        %1309 = vmatprep.subr.mxu0 0.0
        %1310 = vmatpush2.msra.mxu0 0.0
        %1311 = vmatprep.subr.mxu0 0.0
        %1312 = vmatpush2.msra.mxu0 0.0
        %1313 = vmatprep.subr.mxu0 0.0
        %1314 = vmatpush2.msra.mxu0 0.0
        %1315 = vmatprep.subr.mxu0 0.0
        %1316 = vmatpush2.msra.mxu0 0.0
        %1317 = vmatprep.subr.mxu0 0.0
        %1318 = vmatpush2.msra.mxu0 0.0
        %1319 = vmatprep.subr.mxu0 0.0
        %1320 = vmatpush2.msra.mxu0 0.0
        %1321 = vmatprep.mubr.f32.mxu0 0.0
        %1322 = vmatmul.mubr.f32.gmra.mxu0 %v1255
        %v1323 = vpop.f32.mrf.mxu0
        %v1324 = vadd.f32 0.0, %v1323
        %v1325 = vpop.f32.mrf.mxu0
        %1326 = vdwg.mxu0
        %v1327 = vadd.f32 %v1254, %v1324
        %v1328 = vxor.u32 %v1327, 2147483648
        %v1329 = vmul.f32 %v1328, 1.442695
        %v1330 = vpow.pop %v1329
        %v1331 = vadd.f32 %v1330, 1.0
        %v1332 = vrcp.pop %v1331
        %v1333 = vmul.f32 1.0, %v1332
        %v1334 = vtanh.pop %v1327
        %v1335 = vmul.f32 %v1333, %v1238
        %1337 = vrot.lane.b32.xlu0 %v1334, 32
        %v1338 = vpop.permute.xlu0 %1337
        %v1340 = vmul.f32 %v1333, %v1338
        %1342 = vrot.lane.b32.xlu0 %v1340, 32
        %v1343 = vpop.permute.xlu0 %1342
        %v1345 = vadd.f32 %v1335, %v1343
        %v1346 = vtanh.pop %v1345
        %1348 = vrot.lane.b32.xlu0 %v1346, 32
        %v1349 = vpop.permute.xlu0 %1348
        %v1351 = vmul.f32 %v1333, %v1349
        %s1352 = sadd.s32 %s310, 7
        %1354 = vrot.lane.b32.xlu0 %v1351, 64
        %v1355 = vpop.permute.xlu0 %1354
        %s1357 = smul.u32 %s1352, 8
        %s1358 = scalar_lea.vmem [#allocation2], %s1357
        %1359 = vst.msk [vmem:[%s1358] sm:$0xff] %vm359, %v1355
        %1360 = vst.msk [vmem:[#allocation4] sm:$0xff] %vm359, %v1355
        %1362 = vrot.lane.b32.xlu0 %v1345, 96
        %v1363 = vpop.permute.xlu0 %1362
        %1365 = vst.msk [vmem:[#allocation5] sm:$0xff] %vm359, %v1363
        // Predicated region
        $region61: #{tpu_custom_call.1} parent=39 // pred_check
          %p1366 = pneg %p312
        $region62: #{tpu_custom_call.1} parent=39 // pred_check_branch
          %1368 = sbr.rel (%p1366) target = $region64
        $region63: #{tpu_custom_call.1} parent=39 // pred_region
          %v1369 = vld [vmem:[%s4] sm:$0xff]
          %v1370 = vld [vmem:[%s4 + $0x8] sm:$0xff]
          %v1371 = vld [vmem:[%s4 + $0x10] sm:$0xff]
          %v1372 = vld [vmem:[%s4 + $0x18] sm:$0xff]
          %v1373 = vld [vmem:[%s5] sm:$0x1]
          %v1375 = vlaneseq
          %v1376 = vshrl.u32 %v1375, 7
          %v1377 = vsub.s32 0, %v1376
          %v1378 = vrot.slane %v1373, %v1377
          %v1380 = vsel %vm359, %v1355, 0
          %1382 = vmatprep.subr.mxu0 0.0
          %1383 = vmatpush1.msra.mxu0 0.0
          %1384 = vmatprep.subr.mxu0 0.0
          %1385 = vmatpush1.msra.mxu0 0.0
          %1386 = vmatprep.subr.mxu0 0.0
          %1387 = vmatpush1.msra.mxu0 0.0
          %1388 = vmatprep.subr.mxu0 0.0
          %1389 = vmatpush1.msra.mxu0 0.0
          %1390 = vmatprep.subr.mxu0 0.0
          %1391 = vmatpush1.msra.mxu0 0.0
          %1392 = vmatprep.subr.mxu0 0.0
          %1393 = vmatpush1.msra.mxu0 0.0
          %1394 = vmatprep.subr.mxu0 0.0
          %1395 = vmatpush1.msra.mxu0 0.0
          %1396 = vmatprep.subr.mxu0 0.0
          %1397 = vmatpush1.msra.mxu0 0.0
          %1398 = vmatprep.subr.mxu0 0.0
          %1399 = vmatpush1.msra.mxu0 0.0
          %1400 = vmatprep.subr.mxu0 0.0
          %1401 = vmatpush1.msra.mxu0 0.0
          %1402 = vmatprep.subr.mxu0 0.0
          %1403 = vmatpush1.msra.mxu0 0.0
          %1404 = vmatprep.subr.mxu0 0.0
          %1405 = vmatpush1.msra.mxu0 0.0
          %1406 = vmatprep.subr.mxu0 0.0
          %1407 = vmatpush1.msra.mxu0 %v1372
          %1408 = vmatprep.subr.mxu0 0.0
          %1409 = vmatpush1.msra.mxu0 %v1371
          %1410 = vmatprep.subr.mxu0 0.0
          %1411 = vmatpush1.msra.mxu0 %v1370
          %1412 = vmatprep.subr.mxu0 0.0
          %1413 = vmatpush1.msra.mxu0 %v1369
          %1414 = vmatprep.subr.mxu0 0.0
          %1415 = vmatpush2.msra.mxu0 0.0
          %1416 = vmatprep.subr.mxu0 0.0
          %1417 = vmatpush2.msra.mxu0 0.0
          %1418 = vmatprep.subr.mxu0 0.0
          %1419 = vmatpush2.msra.mxu0 0.0
          %1420 = vmatprep.subr.mxu0 0.0
          %1421 = vmatpush2.msra.mxu0 0.0
          %1422 = vmatprep.subr.mxu0 0.0
          %1423 = vmatpush2.msra.mxu0 0.0
          %1424 = vmatprep.subr.mxu0 0.0
          %1425 = vmatpush2.msra.mxu0 0.0
          %1426 = vmatprep.subr.mxu0 0.0
          %1427 = vmatpush2.msra.mxu0 0.0
          %1428 = vmatprep.subr.mxu0 0.0
          %1429 = vmatpush2.msra.mxu0 0.0
          %1430 = vmatprep.subr.mxu0 0.0
          %1431 = vmatpush2.msra.mxu0 0.0
          %1432 = vmatprep.subr.mxu0 0.0
          %1433 = vmatpush2.msra.mxu0 0.0
          %1434 = vmatprep.subr.mxu0 0.0
          %1435 = vmatpush2.msra.mxu0 0.0
          %1436 = vmatprep.subr.mxu0 0.0
          %1437 = vmatpush2.msra.mxu0 0.0
          %1438 = vmatprep.subr.mxu0 0.0
          %1439 = vmatpush2.msra.mxu0 0.0
          %1440 = vmatprep.subr.mxu0 0.0
          %1441 = vmatpush2.msra.mxu0 0.0
          %1442 = vmatprep.subr.mxu0 0.0
          %1443 = vmatpush2.msra.mxu0 0.0
          %1444 = vmatprep.subr.mxu0 0.0
          %1445 = vmatpush2.msra.mxu0 0.0
          %1446 = vmatprep.mubr.f32.mxu0 0.0
          %1447 = vmatmul.mubr.f32.gmra.mxu0 %v1380
          %v1448 = vpop.f32.mrf.mxu0
          %v1449 = vadd.f32 %v1378, %v1448
          %v1450 = vpop.f32.mrf.mxu0
          %1451 = vdwg.mxu0
          %vm1452 = vcmask 31744
          %1453 = vst.msk [vmem:[%s309] sm:$0xff] %vm1452, %v1449
        $region64: #{tpu_custom_call.1} parent=39 // pred_fallthru
          _
        %p1454 = scmp.lt.s32.totalorder %s27, 1
        %s1455 = scalar_select %p1454, %s27, 1
        %s1456 = smul.addr %s1455, 8
        %s1457 = scalar_lea.vmem %s6, %s1456
        // Predicated region
        $region65: #{tpu_custom_call.1} parent=39 // pred_check
          %p1458 = pneg %p173
        $region66: #{tpu_custom_call.1} parent=39 // pred_check_branch
          %1460 = sbr.rel (%p1458) target = $region68
        $region67: #{tpu_custom_call.1} parent=39 // pred_region
          _
        $region68: #{tpu_custom_call.1} parent=39 // pred_fallthru
          _
      $region40: #{tpu_custom_call.1} parent=5 // pred_fallthru
        _
      %p1461 = scmp.le.s32.totalorder 2, %s18
      // Predicated region
      $region69: #{tpu_custom_call.1} parent=5 // pred_check
        %p1462 = pneg %p1461
      $region70: #{tpu_custom_call.1} parent=5 // pred_check_branch
        %1464 = sbr.rel (%p1462) target = $region72
      $region71: #{tpu_custom_call.1} parent=5 // pred_region
        %s1465 = ssub.s32 %s18, 2
        // Predicated region
        $region73: #{tpu_custom_call.1} parent=71 // pred_check
          %p1466 = pneg %p179
        $region74: #{tpu_custom_call.1} parent=71 // pred_check_branch
          %1468 = sbr.rel (%p1466) target = $region76
        $region75: #{tpu_custom_call.1} parent=71 // pred_region
          %p1469 = scmp.lt.s32.totalorder %s29, 1
          %s1470 = scalar_select %p1469, %s29, 1
          %s1471 = smul.addr %s1470, 8
          %s1472 = scalar_lea.vmem %s6, %s1471
        $region76: #{tpu_custom_call.1} parent=71 // pred_fallthru
          _
      $region72: #{tpu_custom_call.1} parent=5 // pred_fallthru
        _
    $region6: #{tpu_custom_call.1} parent=1 // loop_footer
      %s22 = sadd.s32 1, %s18
    $region7: #{tpu_custom_call.1} parent=1 // loop_footer_branch
      %17 = sbr.rel target = $region3
    $region8: #{tpu_custom_call.1} parent=1 // loop_exit
      _
    %1473 = vsyncpa [#allocation8], 1
    %s1474 = scalar_lea.sflag [#allocation8], 1
    %1475 = vsyncpa %s1474, 1
    %1476 = vsyncpa [#allocation10], 1
    %s1477 = scalar_lea.sflag [#allocation10], 1
    %1478 = vsyncpa %s1477, 1
  %1479 = vsyncmov [#allocation6]
  %s1480 = vpop.sfrf %1479
  %p1481 = scmp.eq.s32.totalorder %s1480, 0
  %p1482 = pneg %p1481
  %1484 = shalt.err (%p1482)

</llo_original>
